<compile_context>
chip_gen: v5e
topology: v5e:2x2
jax: 0.10.0
libtpu: 0.0.40
codegen_flags: <defaults>
</compile_context>

<pallas_src>
import functools
import math

import jax
import jax.numpy as jnp
from jax import lax
from jax.experimental import pallas as pl
from jax.experimental.pallas import tpu as pltpu


def _make_divisible(v, divisor, min_value=None):
    if min_value is None:
        min_value = divisor
    new_v = max(min_value, int(v + divisor / 2) // divisor * divisor)
    if new_v < 0.9 * v:
        new_v += divisor
    return new_v


# ------------------------------ in-kernel helpers ------------------------------

def _dw3x3(x, w9, bias_col, mask8, H, W):
    """Depthwise 3x3 conv (stride 1, SAME) on a (C, H*W) tile.

    Spatial flattened onto the lane axis; each off-center tap is a static
    pltpu.roll (XLU) plus a precomputed boundary-mask row (const input).
    w9: (C, 9) BN-folded taps, row-major (dy, dx).  The center tap (no roll,
    no mask) initialises the accumulator with the per-channel bias folded in.
    """
    M = H * W
    acc = x * w9[:, 4:5] + bias_col            # center tap + bias as the init
    mi = 0
    t = 0
    for ddy in (-1, 0, 1):
        for ddx in (-1, 0, 1):
            if ddy == 0 and ddx == 0:
                t += 1
                continue
            s = ddy * W + ddx
            shifted = pltpu.roll(x, shift=(-s) % M, axis=1)
            acc = acc + (shifted * mask8[mi:mi + 1, :]) * w9[:, t:t + 1]
            mi += 1
            t += 1
    return acc


# ----------------------------------- kernel -----------------------------------

def _ghost_bottleneck_kernel(x_ref, w1_ref, w2_ref, sered_ref, seexp_ref, mask_ref,
                             o_ref, *, H, W, in_chs, mid, out_chs):
    init1 = w1_ref.shape[0]
    new1 = mid - init1
    init2 = w2_ref.shape[0]
    new2 = out_chs - init2
    reduced = sered_ref.shape[0]

    x = x_ref[...]                                   # (in_chs, M); also the residual
    mask8 = mask_ref[...]                            # (8, M)

    w1_pw = w1_ref[:, 0:in_chs]                      # (init1, in_chs)  BN folded
    w1_dw = w1_ref[:, in_chs:in_chs + 9]             # (init1, 9)       BN folded
    b1_pw = w1_ref[:, in_chs + 9:in_chs + 10]        # (init1, 1)
    b1_dw = w1_ref[:, in_chs + 10:in_chs + 11]       # (init1, 1)

    # ---- ghost1 primary: 1x1 conv as unrolled VPU FMA over in_chs + bias + ReLU ----
    acc = w1_pw[:, 0:1] * x[0:1, :]
    for k in range(1, in_chs):
        acc = acc + w1_pw[:, k:k + 1] * x[k:k + 1, :]
    x1 = jnp.maximum(acc + b1_pw, 0.0)               # (init1, M)

    # ---- ghost1 cheap op: dw3x3 + bias + ReLU, only the channels that are kept ----
    if new1 > 0:
        x2 = jnp.maximum(
            _dw3x3(x1[0:new1, :], w1_dw[0:new1, :], b1_dw[0:new1, :], mask8, H, W),
            0.0)                                     # (new1, M)
    else:
        x2 = None
    # g1 = concat([x1, x2])[:mid] is never materialised; rows are consumed directly.

    def g1_row(c):
        return x1[c:c + 1, :] if c < init1 else x2[c - init1:c - init1 + 1, :]

    # ---- SE: per-channel global average pool + two tiny FCs (VPU) + hard-sigmoid ----
    p1 = jnp.mean(x1, axis=1, keepdims=True)          # (init1, 1)
    p2 = jnp.mean(x2, axis=1, keepdims=True) if new1 > 0 else None

    def g1_pool(c):
        return p1[c:c + 1, :] if c < init1 else p2[c - init1:c - init1 + 1, :]

    se_wrT = sered_ref[:, 0:mid]                      # (reduced, mid)
    se_br = sered_ref[:, mid:mid + 1]                 # (reduced, 1)
    se_weT = seexp_ref[:, 0:reduced]                  # (mid, reduced)
    se_be = seexp_ref[:, reduced:reduced + 1]         # (mid, 1)

    r = se_br
    for c in range(mid):
        r = r + se_wrT[:, c:c + 1] * g1_pool(c)       # (reduced, 1)
    r = jnp.maximum(r, 0.0)
    e = se_be
    for j in range(reduced):
        e = e + se_weT[:, j:j + 1] * r[j:j + 1, :]    # (mid, 1)
    gate = jnp.clip(e + 3.0, 0.0, 6.0) * (1.0 / 6.0)  # (mid, 1) hard_sigmoid

    # ---- ghost2 primary: 1x1 conv with the SE gate folded into the weight columns ----
    w2_pw = w2_ref[:, 0:mid]                          # (init2, mid)  BN folded
    w2_dw = w2_ref[:, mid:mid + 9]                    # (init2, 9)    BN folded
    b2_pw = w2_ref[:, mid + 9:mid + 10]               # (init2, 1)
    b2_dw = w2_ref[:, mid + 10:mid + 11]              # (init2, 1)

    acc2 = (w2_pw[:, 0:1] * gate[0:1, :]) * g1_row(0)
    for c in range(1, mid):
        acc2 = acc2 + (w2_pw[:, c:c + 1] * gate[c:c + 1, :]) * g1_row(c)
    y1 = acc2 + b2_pw                                 # (init2, M), no ReLU

    # ---- ghost concat + identity residual, written as two sub-slice stores ----
    o_ref[0:init2, :] = y1 + x[0:init2, :]
    if new2 > 0:
        y2 = _dw3x3(y1[0:new2, :], w2_dw[0:new2, :], b2_dw[0:new2, :], mask8, H, W)
        o_ref[init2:out_chs, :] = y2 + x[init2:out_chs, :]


# ------------------------- parameters / forward -------------------------

def _fold_bn(gamma, beta, mean, var, eps=1e-5):
    scale = gamma / jnp.sqrt(var + eps)
    bias = beta - mean * scale
    return scale, bias


def init_params(key, in_chs, mid_chs, out_chs, se_ratio=0.25, dw_size=3):
    keys = iter(jax.random.split(key, 40))

    def nrm(shape, s=0.3):
        return s * jax.random.normal(next(keys), shape, jnp.float32)

    def bn(c):
        gamma = 1.0 + 0.2 * jax.random.normal(next(keys), (c,), jnp.float32)
        beta = 0.1 * jax.random.normal(next(keys), (c,), jnp.float32)
        mean = 0.1 * jax.random.normal(next(keys), (c,), jnp.float32)
        var = 1.0 + 0.2 * jax.random.uniform(next(keys), (c,), jnp.float32)
        s, b = _fold_bn(gamma, beta, mean, var)
        return s.reshape(1, -1), b.reshape(1, -1)

    p = {}
    init1 = math.ceil(mid_chs / 2)
    p['g1_pw_w'] = nrm((in_chs, init1))
    p['g1_pw_scale'], p['g1_pw_bias'] = bn(init1)
    p['g1_dw_w'] = nrm((dw_size, dw_size, init1))
    p['g1_dw_scale'], p['g1_dw_bias'] = bn(init1)
    reduced = _make_divisible(mid_chs * se_ratio, 4)
    p['se_wr'] = nrm((mid_chs, reduced))
    p['se_br'] = nrm((1, reduced), 0.1)
    p['se_we'] = nrm((reduced, mid_chs))
    p['se_be'] = nrm((1, mid_chs), 0.1)
    init2 = math.ceil(out_chs / 2)
    p['g2_pw_w'] = nrm((mid_chs, init2))
    p['g2_pw_scale'], p['g2_pw_bias'] = bn(init2)
    p['g2_dw_w'] = nrm((dw_size, dw_size, init2))
    p['g2_dw_scale'], p['g2_dw_bias'] = bn(init2)
    return p


def _build_dw_mask(H, W):
    """(8, H*W) float mask, one row per non-center 3x3 tap (row-major tap order)."""
    M = H * W
    pos = jnp.arange(M, dtype=jnp.int32)
    row = pos // W
    col = pos % W
    rows = []
    for ddy in (-1, 0, 1):
        for ddx in (-1, 0, 1):
            if ddy == 0 and ddx == 0:
                continue
            valid = ((row + ddy >= 0) & (row + ddy < H) &
                     (col + ddx >= 0) & (col + ddx < W))
            rows.append(valid.astype(jnp.float32))
    return jnp.stack(rows, axis=0)


def ghost_bottleneck_forward(params, x_nchw, *, in_chs, mid_chs, out_chs):
    assert in_chs == out_chs, "identity-shortcut / stride=1 config only"
    N, C, H, W = x_nchw.shape
    assert C == in_chs
    M = H * W
    x = x_nchw.reshape(N, in_chs, M).astype(jnp.float32)   # NCHW -> (N, C, H*W)

    init1 = math.ceil(mid_chs / 2)
    init2 = math.ceil(out_chs / 2)

    # ---- fold BN scales into conv weights; pack tiny per-channel params ----
    s1p = params['g1_pw_scale'].reshape(-1, 1); b1p = params['g1_pw_bias'].reshape(-1, 1)
    s1d = params['g1_dw_scale'].reshape(-1, 1); b1d = params['g1_dw_bias'].reshape(-1, 1)
    s2p = params['g2_pw_scale'].reshape(-1, 1); b2p = params['g2_pw_bias'].reshape(-1, 1)
    s2d = params['g2_dw_scale'].reshape(-1, 1); b2d = params['g2_dw_bias'].reshape(-1, 1)

    w1_pw = params['g1_pw_w'].T * s1p                                     # (init1, in_chs)
    w1_dw = params['g1_dw_w'].transpose(2, 0, 1).reshape(init1, 9) * s1d  # (init1, 9)
    w2_pw = params['g2_pw_w'].T * s2p                                     # (init2, mid)
    w2_dw = params['g2_dw_w'].transpose(2, 0, 1).reshape(init2, 9) * s2d  # (init2, 9)

    w1_pack = jnp.concatenate([w1_pw, w1_dw, b1p, b1d], axis=1)       # (init1, in_chs+11)
    w2_pack = jnp.concatenate([w2_pw, w2_dw, b2p, b2d], axis=1)       # (init2, mid+11)
    se_red = jnp.concatenate([params['se_wr'].T, params['se_br'].reshape(-1, 1)], axis=1)
    se_exp = jnp.concatenate([params['se_we'].T, params['se_be'].reshape(-1, 1)], axis=1)
    mask8 = _build_dw_mask(H, W)                                       # (8, M)

    kernel = functools.partial(_ghost_bottleneck_kernel, H=H, W=W,
                               in_chs=in_chs, mid=mid_chs, out_chs=out_chs)
    const2d = lambda n: (0, 0)                 # const blocks stay VMEM-resident

    out = pl.pallas_call(
        kernel,
        grid=(N,),
        in_specs=[
            pl.BlockSpec((None, in_chs, M), lambda n: (n, 0, 0)),   # x (also residual)
            pl.BlockSpec(w1_pack.shape, const2d),
            pl.BlockSpec(w2_pack.shape, const2d),
            pl.BlockSpec(se_red.shape, const2d),
            pl.BlockSpec(se_exp.shape, const2d),
            pl.BlockSpec(mask8.shape, const2d),
        ],
        out_specs=pl.BlockSpec((None, out_chs, M), lambda n: (n, 0, 0)),
        out_shape=jax.ShapeDtypeStruct((N, out_chs, M), jnp.float32),
        compiler_params=pltpu.CompilerParams(dimension_semantics=("parallel",)),
    )(x, w1_pack, w2_pack, se_red, se_exp, mask8)

    return out.reshape(N, out_chs, H, W)


# ---------------------------- pure-JAX reference ----------------------------

def _ref_forward(params, x_nchw, in_chs, mid_chs, out_chs):
    x = jnp.transpose(x_nchw, (0, 2, 3, 1)).astype(jnp.float32)
    residual = x

    def pw(xx, w, s, b, relu):
        y = jnp.einsum('nhwc,co->nhwo', xx, w) * s.reshape(1, 1, 1, -1) + b.reshape(1, 1, 1, -1)
        return jnp.maximum(y, 0.0) if relu else y

    def dw(xx, w, s, b, relu):
        C = xx.shape[-1]
        y = lax.conv_general_dilated(
            xx, w.reshape(3, 3, 1, C), window_strides=(1, 1),
            padding=((1, 1), (1, 1)),
            dimension_numbers=('NHWC', 'HWIO', 'NHWC'), feature_group_count=C)
        y = y * s.reshape(1, 1, 1, -1) + b.reshape(1, 1, 1, -1)
        return jnp.maximum(y, 0.0) if relu else y

    x1 = pw(x, params['g1_pw_w'], params['g1_pw_scale'], params['g1_pw_bias'], True)
    x2 = dw(x1, params['g1_dw_w'], params['g1_dw_scale'], params['g1_dw_bias'], True)
    g1 = jnp.concatenate([x1, x2], -1)[..., :mid_chs]

    pooled = jnp.mean(g1, axis=(1, 2))
    r = jnp.maximum(pooled @ params['se_wr'] + params['se_br'], 0.0)
    e = r @ params['se_we'] + params['se_be']
    gate = jnp.clip(e + 3.0, 0.0, 6.0) / 6.0
    g1 = g1 * gate[:, None, None, :]

    y1 = pw(g1, params['g2_pw_w'], params['g2_pw_scale'], params['g2_pw_bias'], False)
    y2 = dw(y1, params['g2_dw_w'], params['g2_dw_scale'], params['g2_dw_bias'], False)
    g2 = jnp.concatenate([y1, y2], -1)[..., :out_chs]
    return jnp.transpose(g2 + residual, (0, 3, 1, 2))


if __name__ == "__main__":
    key = jax.random.PRNGKey(0)
    kp, kx = jax.random.split(key)

    in_chs, mid_chs, out_chs = 4, 8, 4         # stride=1, se_ratio=0.25
    N, H, W = 2, 16, 16

    params = init_params(kp, in_chs, mid_chs, out_chs, se_ratio=0.25)
    x = jax.random.normal(kx, (N, in_chs, H, W), jnp.float32)

    out = ghost_bottleneck_forward(params, x, in_chs=in_chs, mid_chs=mid_chs, out_chs=out_chs)
    out = jax.block_until_ready(out)

    ref = _ref_forward(params, x, in_chs, mid_chs, out_chs)
    assert out.shape == (N, out_chs, H, W)
    if not jnp.allclose(out, ref, atol=1e-4, rtol=1e-4):
        raise AssertionError("Pallas GhostBottleneck does not match JAX reference")
    print("KERNEL_OK")
</pallas_src>

<mosaic_0001>
module attributes {stable_mosaic.version = 11 : i64} {
  func.func @_ghost_bottleneck_kernel(%arg0: i32, %arg1: memref<1x4x256xf32, #tpu.memory_space<vmem>>, %arg2: memref<4x15xf32, #tpu.memory_space<vmem>>, %arg3: memref<2x19xf32, #tpu.memory_space<vmem>>, %arg4: memref<4x9xf32, #tpu.memory_space<vmem>>, %arg5: memref<8x5xf32, #tpu.memory_space<vmem>>, %arg6: memref<8x256xf32, #tpu.memory_space<vmem>>, %arg7: memref<1x4x256xf32, #tpu.memory_space<vmem>>) attributes {dimension_semantics = [#tpu.dimension_semantics<parallel>], iteration_bounds = array<i64: 2>, scalar_prefetch = 0 : i64, scratch_operands = 0 : i64, tpu.core_type = #tpu.core_type<tc>, window_params = [{transform_indices = @transform_0, window_bounds = array<i64: 1, 4, 256>}, {pipeline_mode = #tpu.pipeline_mode<synchronous>, transform_indices = @transform_1, window_bounds = array<i64: 4, 15>}, {pipeline_mode = #tpu.pipeline_mode<synchronous>, transform_indices = @transform_2, window_bounds = array<i64: 2, 19>}, {pipeline_mode = #tpu.pipeline_mode<synchronous>, transform_indices = @transform_3, window_bounds = array<i64: 4, 9>}, {pipeline_mode = #tpu.pipeline_mode<synchronous>, transform_indices = @transform_4, window_bounds = array<i64: 8, 5>}, {pipeline_mode = #tpu.pipeline_mode<synchronous>, transform_indices = @transform_5, window_bounds = array<i64: 8, 256>}, {transform_indices = @transform_6, window_bounds = array<i64: 1, 4, 256>}]} {
    %c0 = arith.constant 0 : index
    %c0_0 = arith.constant 0 : index
    %c0_1 = arith.constant 0 : index
    %0 = vector.load %arg1[%c0, %c0_0, %c0_1] : memref<1x4x256xf32, #tpu.memory_space<vmem>>, vector<1x4x256xf32>
    %1 = vector.shape_cast %0 : vector<1x4x256xf32> to vector<4x256xf32>
    %c0_2 = arith.constant 0 : index
    %c0_3 = arith.constant 0 : index
    %2 = vector.load %arg6[%c0_2, %c0_3] : memref<8x256xf32, #tpu.memory_space<vmem>>, vector<8x256xf32>
    %c0_4 = arith.constant 0 : index
    %c0_5 = arith.constant 0 : index
    %3 = vector.load %arg2[%c0_4, %c0_5] : memref<4x15xf32, #tpu.memory_space<vmem>>, vector<4x4xf32>
    %c0_6 = arith.constant 0 : index
    %c4 = arith.constant 4 : index
    %4 = vector.load %arg2[%c0_6, %c4] : memref<4x15xf32, #tpu.memory_space<vmem>>, vector<4x9xf32>
    %c0_7 = arith.constant 0 : index
    %c13 = arith.constant 13 : index
    %5 = vector.load %arg2[%c0_7, %c13] : memref<4x15xf32, #tpu.memory_space<vmem>>, vector<4x1xf32>
    %c0_8 = arith.constant 0 : index
    %c14 = arith.constant 14 : index
    %6 = vector.load %arg2[%c0_8, %c14] : memref<4x15xf32, #tpu.memory_space<vmem>>, vector<4x1xf32>
    %7 = vector.extract_strided_slice %3 {offsets = [0, 0], sizes = [4, 1], strides = [1, 1]} : vector<4x4xf32> to vector<4x1xf32>
    %8 = vector.extract_strided_slice %1 {offsets = [0, 0], sizes = [1, 256], strides = [1, 1]} : vector<4x256xf32> to vector<1x256xf32>
    %9 = vector.broadcast %7 : vector<4x1xf32> to vector<4x256xf32>
    %10 = vector.broadcast %8 : vector<1x256xf32> to vector<4x256xf32>
    %11 = arith.mulf %9, %10 : vector<4x256xf32>
    %12 = vector.extract_strided_slice %3 {offsets = [0, 1], sizes = [4, 1], strides = [1, 1]} : vector<4x4xf32> to vector<4x1xf32>
    %13 = vector.extract_strided_slice %1 {offsets = [1, 0], sizes = [1, 256], strides = [1, 1]} : vector<4x256xf32> to vector<1x256xf32>
    %14 = vector.broadcast %12 : vector<4x1xf32> to vector<4x256xf32>
    %15 = vector.broadcast %13 : vector<1x256xf32> to vector<4x256xf32>
    %16 = arith.mulf %14, %15 : vector<4x256xf32>
    %17 = arith.addf %11, %16 : vector<4x256xf32>
    %18 = vector.extract_strided_slice %3 {offsets = [0, 2], sizes = [4, 1], strides = [1, 1]} : vector<4x4xf32> to vector<4x1xf32>
    %19 = vector.extract_strided_slice %1 {offsets = [2, 0], sizes = [1, 256], strides = [1, 1]} : vector<4x256xf32> to vector<1x256xf32>
    %20 = vector.broadcast %18 : vector<4x1xf32> to vector<4x256xf32>
    %21 = vector.broadcast %19 : vector<1x256xf32> to vector<4x256xf32>
    %22 = arith.mulf %20, %21 : vector<4x256xf32>
    %23 = arith.addf %17, %22 : vector<4x256xf32>
    %24 = vector.extract_strided_slice %3 {offsets = [0, 3], sizes = [4, 1], strides = [1, 1]} : vector<4x4xf32> to vector<4x1xf32>
    %25 = vector.extract_strided_slice %1 {offsets = [3, 0], sizes = [1, 256], strides = [1, 1]} : vector<4x256xf32> to vector<1x256xf32>
    %26 = vector.broadcast %24 : vector<4x1xf32> to vector<4x256xf32>
    %27 = vector.broadcast %25 : vector<1x256xf32> to vector<4x256xf32>
    %28 = arith.mulf %26, %27 : vector<4x256xf32>
    %29 = arith.addf %23, %28 : vector<4x256xf32>
    %30 = vector.broadcast %5 : vector<4x1xf32> to vector<4x256xf32>
    %31 = arith.addf %29, %30 : vector<4x256xf32>
    %cst = arith.constant 0.000000e+00 : f32
    %32 = vector.broadcast %cst : f32 to vector<4x256xf32>
    %33 = arith.maximumf %31, %32 : vector<4x256xf32>
    %34 = vector.extract_strided_slice %4 {offsets = [0, 4], sizes = [4, 1], strides = [1, 1]} : vector<4x9xf32> to vector<4x1xf32>
    %35 = vector.broadcast %34 : vector<4x1xf32> to vector<4x256xf32>
    %36 = arith.mulf %33, %35 : vector<4x256xf32>
    %37 = vector.broadcast %6 : vector<4x1xf32> to vector<4x256xf32>
    %38 = arith.addf %36, %37 : vector<4x256xf32>
    %c17_i32 = arith.constant 17 : i32
    %39 = tpu.dynamic_rotate %33 by %c17_i32 dim 1 : vector<4x256xf32>, i32 -> vector<4x256xf32>
    %40 = vector.extract_strided_slice %2 {offsets = [0, 0], sizes = [1, 256], strides = [1, 1]} : vector<8x256xf32> to vector<1x256xf32>
    %41 = vector.broadcast %40 : vector<1x256xf32> to vector<4x256xf32>
    %42 = arith.mulf %39, %41 : vector<4x256xf32>
    %43 = vector.extract_strided_slice %4 {offsets = [0, 0], sizes = [4, 1], strides = [1, 1]} : vector<4x9xf32> to vector<4x1xf32>
    %44 = vector.broadcast %43 : vector<4x1xf32> to vector<4x256xf32>
    %45 = arith.mulf %42, %44 : vector<4x256xf32>
    %46 = arith.addf %38, %45 : vector<4x256xf32>
    %c16_i32 = arith.constant 16 : i32
    %47 = tpu.dynamic_rotate %33 by %c16_i32 dim 1 : vector<4x256xf32>, i32 -> vector<4x256xf32>
    %48 = vector.extract_strided_slice %2 {offsets = [1, 0], sizes = [1, 256], strides = [1, 1]} : vector<8x256xf32> to vector<1x256xf32>
    %49 = vector.broadcast %48 : vector<1x256xf32> to vector<4x256xf32>
    %50 = arith.mulf %47, %49 : vector<4x256xf32>
    %51 = vector.extract_strided_slice %4 {offsets = [0, 1], sizes = [4, 1], strides = [1, 1]} : vector<4x9xf32> to vector<4x1xf32>
    %52 = vector.broadcast %51 : vector<4x1xf32> to vector<4x256xf32>
    %53 = arith.mulf %50, %52 : vector<4x256xf32>
    %54 = arith.addf %46, %53 : vector<4x256xf32>
    %c15_i32 = arith.constant 15 : i32
    %55 = tpu.dynamic_rotate %33 by %c15_i32 dim 1 : vector<4x256xf32>, i32 -> vector<4x256xf32>
    %56 = vector.extract_strided_slice %2 {offsets = [2, 0], sizes = [1, 256], strides = [1, 1]} : vector<8x256xf32> to vector<1x256xf32>
    %57 = vector.broadcast %56 : vector<1x256xf32> to vector<4x256xf32>
    %58 = arith.mulf %55, %57 : vector<4x256xf32>
    %59 = vector.extract_strided_slice %4 {offsets = [0, 2], sizes = [4, 1], strides = [1, 1]} : vector<4x9xf32> to vector<4x1xf32>
    %60 = vector.broadcast %59 : vector<4x1xf32> to vector<4x256xf32>
    %61 = arith.mulf %58, %60 : vector<4x256xf32>
    %62 = arith.addf %54, %61 : vector<4x256xf32>
    %c1_i32 = arith.constant 1 : i32
    %63 = tpu.dynamic_rotate %33 by %c1_i32 dim 1 : vector<4x256xf32>, i32 -> vector<4x256xf32>
    %64 = vector.extract_strided_slice %2 {offsets = [3, 0], sizes = [1, 256], strides = [1, 1]} : vector<8x256xf32> to vector<1x256xf32>
    %65 = vector.broadcast %64 : vector<1x256xf32> to vector<4x256xf32>
    %66 = arith.mulf %63, %65 : vector<4x256xf32>
    %67 = vector.extract_strided_slice %4 {offsets = [0, 3], sizes = [4, 1], strides = [1, 1]} : vector<4x9xf32> to vector<4x1xf32>
    %68 = vector.broadcast %67 : vector<4x1xf32> to vector<4x256xf32>
    %69 = arith.mulf %66, %68 : vector<4x256xf32>
    %70 = arith.addf %62, %69 : vector<4x256xf32>
    %c255_i32 = arith.constant 255 : i32
    %71 = tpu.dynamic_rotate %33 by %c255_i32 dim 1 : vector<4x256xf32>, i32 -> vector<4x256xf32>
    %72 = vector.extract_strided_slice %2 {offsets = [4, 0], sizes = [1, 256], strides = [1, 1]} : vector<8x256xf32> to vector<1x256xf32>
    %73 = vector.broadcast %72 : vector<1x256xf32> to vector<4x256xf32>
    %74 = arith.mulf %71, %73 : vector<4x256xf32>
    %75 = vector.extract_strided_slice %4 {offsets = [0, 5], sizes = [4, 1], strides = [1, 1]} : vector<4x9xf32> to vector<4x1xf32>
    %76 = vector.broadcast %75 : vector<4x1xf32> to vector<4x256xf32>
    %77 = arith.mulf %74, %76 : vector<4x256xf32>
    %78 = arith.addf %70, %77 : vector<4x256xf32>
    %c241_i32 = arith.constant 241 : i32
    %79 = tpu.dynamic_rotate %33 by %c241_i32 dim 1 : vector<4x256xf32>, i32 -> vector<4x256xf32>
    %80 = vector.extract_strided_slice %2 {offsets = [5, 0], sizes = [1, 256], strides = [1, 1]} : vector<8x256xf32> to vector<1x256xf32>
    %81 = vector.broadcast %80 : vector<1x256xf32> to vector<4x256xf32>
    %82 = arith.mulf %79, %81 : vector<4x256xf32>
    %83 = vector.extract_strided_slice %4 {offsets = [0, 6], sizes = [4, 1], strides = [1, 1]} : vector<4x9xf32> to vector<4x1xf32>
    %84 = vector.broadcast %83 : vector<4x1xf32> to vector<4x256xf32>
    %85 = arith.mulf %82, %84 : vector<4x256xf32>
    %86 = arith.addf %78, %85 : vector<4x256xf32>
    %c240_i32 = arith.constant 240 : i32
    %87 = tpu.dynamic_rotate %33 by %c240_i32 dim 1 : vector<4x256xf32>, i32 -> vector<4x256xf32>
    %88 = vector.extract_strided_slice %2 {offsets = [6, 0], sizes = [1, 256], strides = [1, 1]} : vector<8x256xf32> to vector<1x256xf32>
    %89 = vector.broadcast %88 : vector<1x256xf32> to vector<4x256xf32>
    %90 = arith.mulf %87, %89 : vector<4x256xf32>
    %91 = vector.extract_strided_slice %4 {offsets = [0, 7], sizes = [4, 1], strides = [1, 1]} : vector<4x9xf32> to vector<4x1xf32>
    %92 = vector.broadcast %91 : vector<4x1xf32> to vector<4x256xf32>
    %93 = arith.mulf %90, %92 : vector<4x256xf32>
    %94 = arith.addf %86, %93 : vector<4x256xf32>
    %c239_i32 = arith.constant 239 : i32
    %95 = tpu.dynamic_rotate %33 by %c239_i32 dim 1 : vector<4x256xf32>, i32 -> vector<4x256xf32>
    %96 = vector.extract_strided_slice %2 {offsets = [7, 0], sizes = [1, 256], strides = [1, 1]} : vector<8x256xf32> to vector<1x256xf32>
    %97 = vector.broadcast %96 : vector<1x256xf32> to vector<4x256xf32>
    %98 = arith.mulf %95, %97 : vector<4x256xf32>
    %99 = vector.extract_strided_slice %4 {offsets = [0, 8], sizes = [4, 1], strides = [1, 1]} : vector<4x9xf32> to vector<4x1xf32>
    %100 = vector.broadcast %99 : vector<4x1xf32> to vector<4x256xf32>
    %101 = arith.mulf %98, %100 : vector<4x256xf32>
    %102 = arith.addf %94, %101 : vector<4x256xf32>
    %cst_9 = arith.constant 0.000000e+00 : f32
    %103 = vector.broadcast %cst_9 : f32 to vector<4x256xf32>
    %104 = arith.maximumf %102, %103 : vector<4x256xf32>
    %cst_10 = arith.constant dense<0.000000e+00> : vector<4xf32>
    %105 = vector.multi_reduction <add>, %33, %cst_10 [1] : vector<4x256xf32> to vector<4xf32>
    %106 = vector.shape_cast %105 : vector<4xf32> to vector<4x1xf32>
    %cst_11 = arith.constant 2.560000e+02 : f32
    %107 = vector.broadcast %cst_11 : f32 to vector<4x1xf32>
    %108 = arith.divf %106, %107 : vector<4x1xf32>
    %cst_12 = arith.constant dense<0.000000e+00> : vector<4xf32>
    %109 = vector.multi_reduction <add>, %104, %cst_12 [1] : vector<4x256xf32> to vector<4xf32>
    %110 = vector.shape_cast %109 : vector<4xf32> to vector<4x1xf32>
    %cst_13 = arith.constant 2.560000e+02 : f32
    %111 = vector.broadcast %cst_13 : f32 to vector<4x1xf32>
    %112 = arith.divf %110, %111 : vector<4x1xf32>
    %c0_14 = arith.constant 0 : index
    %c0_15 = arith.constant 0 : index
    %113 = vector.load %arg4[%c0_14, %c0_15] : memref<4x9xf32, #tpu.memory_space<vmem>>, vector<4x8xf32>
    %c0_16 = arith.constant 0 : index
    %c8 = arith.constant 8 : index
    %114 = vector.load %arg4[%c0_16, %c8] : memref<4x9xf32, #tpu.memory_space<vmem>>, vector<4x1xf32>
    %c0_17 = arith.constant 0 : index
    %c0_18 = arith.constant 0 : index
    %115 = vector.load %arg5[%c0_17, %c0_18] : memref<8x5xf32, #tpu.memory_space<vmem>>, vector<8x4xf32>
    %c0_19 = arith.constant 0 : index
    %c4_20 = arith.constant 4 : index
    %116 = vector.load %arg5[%c0_19, %c4_20] : memref<8x5xf32, #tpu.memory_space<vmem>>, vector<8x1xf32>
    %117 = vector.extract_strided_slice %113 {offsets = [0, 0], sizes = [4, 1], strides = [1, 1]} : vector<4x8xf32> to vector<4x1xf32>
    %118 = vector.extract_strided_slice %108 {offsets = [0, 0], sizes = [1, 1], strides = [1, 1]} : vector<4x1xf32> to vector<1x1xf32>
    %119 = vector.broadcast %118 : vector<1x1xf32> to vector<4x1xf32>
    %120 = arith.mulf %117, %119 : vector<4x1xf32>
    %121 = arith.addf %114, %120 : vector<4x1xf32>
    %122 = vector.extract_strided_slice %113 {offsets = [0, 1], sizes = [4, 1], strides = [1, 1]} : vector<4x8xf32> to vector<4x1xf32>
    %123 = vector.extract_strided_slice %108 {offsets = [1, 0], sizes = [1, 1], strides = [1, 1]} : vector<4x1xf32> to vector<1x1xf32>
    %124 = vector.broadcast %123 : vector<1x1xf32> to vector<4x1xf32>
    %125 = arith.mulf %122, %124 : vector<4x1xf32>
    %126 = arith.addf %121, %125 : vector<4x1xf32>
    %127 = vector.extract_strided_slice %113 {offsets = [0, 2], sizes = [4, 1], strides = [1, 1]} : vector<4x8xf32> to vector<4x1xf32>
    %128 = vector.extract_strided_slice %108 {offsets = [2, 0], sizes = [1, 1], strides = [1, 1]} : vector<4x1xf32> to vector<1x1xf32>
    %129 = vector.broadcast %128 : vector<1x1xf32> to vector<4x1xf32>
    %130 = arith.mulf %127, %129 : vector<4x1xf32>
    %131 = arith.addf %126, %130 : vector<4x1xf32>
    %132 = vector.extract_strided_slice %113 {offsets = [0, 3], sizes = [4, 1], strides = [1, 1]} : vector<4x8xf32> to vector<4x1xf32>
    %133 = vector.extract_strided_slice %108 {offsets = [3, 0], sizes = [1, 1], strides = [1, 1]} : vector<4x1xf32> to vector<1x1xf32>
    %134 = vector.broadcast %133 : vector<1x1xf32> to vector<4x1xf32>
    %135 = arith.mulf %132, %134 : vector<4x1xf32>
    %136 = arith.addf %131, %135 : vector<4x1xf32>
    %137 = vector.extract_strided_slice %113 {offsets = [0, 4], sizes = [4, 1], strides = [1, 1]} : vector<4x8xf32> to vector<4x1xf32>
    %138 = vector.extract_strided_slice %112 {offsets = [0, 0], sizes = [1, 1], strides = [1, 1]} : vector<4x1xf32> to vector<1x1xf32>
    %139 = vector.broadcast %138 : vector<1x1xf32> to vector<4x1xf32>
    %140 = arith.mulf %137, %139 : vector<4x1xf32>
    %141 = arith.addf %136, %140 : vector<4x1xf32>
    %142 = vector.extract_strided_slice %113 {offsets = [0, 5], sizes = [4, 1], strides = [1, 1]} : vector<4x8xf32> to vector<4x1xf32>
    %143 = vector.extract_strided_slice %112 {offsets = [1, 0], sizes = [1, 1], strides = [1, 1]} : vector<4x1xf32> to vector<1x1xf32>
    %144 = vector.broadcast %143 : vector<1x1xf32> to vector<4x1xf32>
    %145 = arith.mulf %142, %144 : vector<4x1xf32>
    %146 = arith.addf %141, %145 : vector<4x1xf32>
    %147 = vector.extract_strided_slice %113 {offsets = [0, 6], sizes = [4, 1], strides = [1, 1]} : vector<4x8xf32> to vector<4x1xf32>
    %148 = vector.extract_strided_slice %112 {offsets = [2, 0], sizes = [1, 1], strides = [1, 1]} : vector<4x1xf32> to vector<1x1xf32>
    %149 = vector.broadcast %148 : vector<1x1xf32> to vector<4x1xf32>
    %150 = arith.mulf %147, %149 : vector<4x1xf32>
    %151 = arith.addf %146, %150 : vector<4x1xf32>
    %152 = vector.extract_strided_slice %113 {offsets = [0, 7], sizes = [4, 1], strides = [1, 1]} : vector<4x8xf32> to vector<4x1xf32>
    %153 = vector.extract_strided_slice %112 {offsets = [3, 0], sizes = [1, 1], strides = [1, 1]} : vector<4x1xf32> to vector<1x1xf32>
    %154 = vector.broadcast %153 : vector<1x1xf32> to vector<4x1xf32>
    %155 = arith.mulf %152, %154 : vector<4x1xf32>
    %156 = arith.addf %151, %155 : vector<4x1xf32>
    %cst_21 = arith.constant 0.000000e+00 : f32
    %157 = vector.broadcast %cst_21 : f32 to vector<4x1xf32>
    %158 = arith.maximumf %156, %157 : vector<4x1xf32>
    %159 = vector.extract_strided_slice %115 {offsets = [0, 0], sizes = [8, 1], strides = [1, 1]} : vector<8x4xf32> to vector<8x1xf32>
    %160 = vector.extract_strided_slice %158 {offsets = [0, 0], sizes = [1, 1], strides = [1, 1]} : vector<4x1xf32> to vector<1x1xf32>
    %161 = vector.broadcast %160 : vector<1x1xf32> to vector<8x1xf32>
    %162 = arith.mulf %159, %161 : vector<8x1xf32>
    %163 = arith.addf %116, %162 : vector<8x1xf32>
    %164 = vector.extract_strided_slice %115 {offsets = [0, 1], sizes = [8, 1], strides = [1, 1]} : vector<8x4xf32> to vector<8x1xf32>
    %165 = vector.extract_strided_slice %158 {offsets = [1, 0], sizes = [1, 1], strides = [1, 1]} : vector<4x1xf32> to vector<1x1xf32>
    %166 = vector.broadcast %165 : vector<1x1xf32> to vector<8x1xf32>
    %167 = arith.mulf %164, %166 : vector<8x1xf32>
    %168 = arith.addf %163, %167 : vector<8x1xf32>
    %169 = vector.extract_strided_slice %115 {offsets = [0, 2], sizes = [8, 1], strides = [1, 1]} : vector<8x4xf32> to vector<8x1xf32>
    %170 = vector.extract_strided_slice %158 {offsets = [2, 0], sizes = [1, 1], strides = [1, 1]} : vector<4x1xf32> to vector<1x1xf32>
    %171 = vector.broadcast %170 : vector<1x1xf32> to vector<8x1xf32>
    %172 = arith.mulf %169, %171 : vector<8x1xf32>
    %173 = arith.addf %168, %172 : vector<8x1xf32>
    %174 = vector.extract_strided_slice %115 {offsets = [0, 3], sizes = [8, 1], strides = [1, 1]} : vector<8x4xf32> to vector<8x1xf32>
    %175 = vector.extract_strided_slice %158 {offsets = [3, 0], sizes = [1, 1], strides = [1, 1]} : vector<4x1xf32> to vector<1x1xf32>
    %176 = vector.broadcast %175 : vector<1x1xf32> to vector<8x1xf32>
    %177 = arith.mulf %174, %176 : vector<8x1xf32>
    %178 = arith.addf %173, %177 : vector<8x1xf32>
    %cst_22 = arith.constant 3.000000e+00 : f32
    %179 = vector.broadcast %cst_22 : f32 to vector<8x1xf32>
    %180 = arith.addf %178, %179 : vector<8x1xf32>
    %cst_23 = arith.constant 0.000000e+00 : f32
    %cst_24 = arith.constant 6.000000e+00 : f32
    %181 = vector.broadcast %cst_23 : f32 to vector<8x1xf32>
    %182 = arith.maximumf %181, %180 : vector<8x1xf32>
    %183 = vector.broadcast %cst_24 : f32 to vector<8x1xf32>
    %184 = arith.minimumf %183, %182 : vector<8x1xf32>
    %cst_25 = arith.constant 0.166666672 : f32
    %185 = vector.broadcast %cst_25 : f32 to vector<8x1xf32>
    %186 = arith.mulf %184, %185 : vector<8x1xf32>
    %c0_26 = arith.constant 0 : index
    %c0_27 = arith.constant 0 : index
    %187 = vector.load %arg3[%c0_26, %c0_27] : memref<2x19xf32, #tpu.memory_space<vmem>>, vector<2x8xf32>
    %c0_28 = arith.constant 0 : index
    %c8_29 = arith.constant 8 : index
    %188 = vector.load %arg3[%c0_28, %c8_29] : memref<2x19xf32, #tpu.memory_space<vmem>>, vector<2x9xf32>
    %c0_30 = arith.constant 0 : index
    %c17 = arith.constant 17 : index
    %189 = vector.load %arg3[%c0_30, %c17] : memref<2x19xf32, #tpu.memory_space<vmem>>, vector<2x1xf32>
    %c0_31 = arith.constant 0 : index
    %c18 = arith.constant 18 : index
    %190 = vector.load %arg3[%c0_31, %c18] : memref<2x19xf32, #tpu.memory_space<vmem>>, vector<2x1xf32>
    %191 = vector.extract_strided_slice %187 {offsets = [0, 0], sizes = [2, 1], strides = [1, 1]} : vector<2x8xf32> to vector<2x1xf32>
    %192 = vector.extract_strided_slice %186 {offsets = [0, 0], sizes = [1, 1], strides = [1, 1]} : vector<8x1xf32> to vector<1x1xf32>
    %193 = vector.broadcast %192 : vector<1x1xf32> to vector<2x1xf32>
    %194 = arith.mulf %191, %193 : vector<2x1xf32>
    %195 = vector.extract_strided_slice %33 {offsets = [0, 0], sizes = [1, 256], strides = [1, 1]} : vector<4x256xf32> to vector<1x256xf32>
    %196 = vector.broadcast %194 : vector<2x1xf32> to vector<2x256xf32>
    %197 = vector.broadcast %195 : vector<1x256xf32> to vector<2x256xf32>
    %198 = arith.mulf %196, %197 : vector<2x256xf32>
    %199 = vector.extract_strided_slice %187 {offsets = [0, 1], sizes = [2, 1], strides = [1, 1]} : vector<2x8xf32> to vector<2x1xf32>
    %200 = vector.extract_strided_slice %186 {offsets = [1, 0], sizes = [1, 1], strides = [1, 1]} : vector<8x1xf32> to vector<1x1xf32>
    %201 = vector.broadcast %200 : vector<1x1xf32> to vector<2x1xf32>
    %202 = arith.mulf %199, %201 : vector<2x1xf32>
    %203 = vector.extract_strided_slice %33 {offsets = [1, 0], sizes = [1, 256], strides = [1, 1]} : vector<4x256xf32> to vector<1x256xf32>
    %204 = vector.broadcast %202 : vector<2x1xf32> to vector<2x256xf32>
    %205 = vector.broadcast %203 : vector<1x256xf32> to vector<2x256xf32>
    %206 = arith.mulf %204, %205 : vector<2x256xf32>
    %207 = arith.addf %198, %206 : vector<2x256xf32>
    %208 = vector.extract_strided_slice %187 {offsets = [0, 2], sizes = [2, 1], strides = [1, 1]} : vector<2x8xf32> to vector<2x1xf32>
    %209 = vector.extract_strided_slice %186 {offsets = [2, 0], sizes = [1, 1], strides = [1, 1]} : vector<8x1xf32> to vector<1x1xf32>
    %210 = vector.broadcast %209 : vector<1x1xf32> to vector<2x1xf32>
    %211 = arith.mulf %208, %210 : vector<2x1xf32>
    %212 = vector.extract_strided_slice %33 {offsets = [2, 0], sizes = [1, 256], strides = [1, 1]} : vector<4x256xf32> to vector<1x256xf32>
    %213 = vector.broadcast %211 : vector<2x1xf32> to vector<2x256xf32>
    %214 = vector.broadcast %212 : vector<1x256xf32> to vector<2x256xf32>
    %215 = arith.mulf %213, %214 : vector<2x256xf32>
    %216 = arith.addf %207, %215 : vector<2x256xf32>
    %217 = vector.extract_strided_slice %187 {offsets = [0, 3], sizes = [2, 1], strides = [1, 1]} : vector<2x8xf32> to vector<2x1xf32>
    %218 = vector.extract_strided_slice %186 {offsets = [3, 0], sizes = [1, 1], strides = [1, 1]} : vector<8x1xf32> to vector<1x1xf32>
    %219 = vector.broadcast %218 : vector<1x1xf32> to vector<2x1xf32>
    %220 = arith.mulf %217, %219 : vector<2x1xf32>
    %221 = vector.extract_strided_slice %33 {offsets = [3, 0], sizes = [1, 256], strides = [1, 1]} : vector<4x256xf32> to vector<1x256xf32>
    %222 = vector.broadcast %220 : vector<2x1xf32> to vector<2x256xf32>
    %223 = vector.broadcast %221 : vector<1x256xf32> to vector<2x256xf32>
    %224 = arith.mulf %222, %223 : vector<2x256xf32>
    %225 = arith.addf %216, %224 : vector<2x256xf32>
    %226 = vector.extract_strided_slice %187 {offsets = [0, 4], sizes = [2, 1], strides = [1, 1]} : vector<2x8xf32> to vector<2x1xf32>
    %227 = vector.extract_strided_slice %186 {offsets = [4, 0], sizes = [1, 1], strides = [1, 1]} : vector<8x1xf32> to vector<1x1xf32>
    %228 = vector.broadcast %227 : vector<1x1xf32> to vector<2x1xf32>
    %229 = arith.mulf %226, %228 : vector<2x1xf32>
    %230 = vector.extract_strided_slice %104 {offsets = [0, 0], sizes = [1, 256], strides = [1, 1]} : vector<4x256xf32> to vector<1x256xf32>
    %231 = vector.broadcast %229 : vector<2x1xf32> to vector<2x256xf32>
    %232 = vector.broadcast %230 : vector<1x256xf32> to vector<2x256xf32>
    %233 = arith.mulf %231, %232 : vector<2x256xf32>
    %234 = arith.addf %225, %233 : vector<2x256xf32>
    %235 = vector.extract_strided_slice %187 {offsets = [0, 5], sizes = [2, 1], strides = [1, 1]} : vector<2x8xf32> to vector<2x1xf32>
    %236 = vector.extract_strided_slice %186 {offsets = [5, 0], sizes = [1, 1], strides = [1, 1]} : vector<8x1xf32> to vector<1x1xf32>
    %237 = vector.broadcast %236 : vector<1x1xf32> to vector<2x1xf32>
    %238 = arith.mulf %235, %237 : vector<2x1xf32>
    %239 = vector.extract_strided_slice %104 {offsets = [1, 0], sizes = [1, 256], strides = [1, 1]} : vector<4x256xf32> to vector<1x256xf32>
    %240 = vector.broadcast %238 : vector<2x1xf32> to vector<2x256xf32>
    %241 = vector.broadcast %239 : vector<1x256xf32> to vector<2x256xf32>
    %242 = arith.mulf %240, %241 : vector<2x256xf32>
    %243 = arith.addf %234, %242 : vector<2x256xf32>
    %244 = vector.extract_strided_slice %187 {offsets = [0, 6], sizes = [2, 1], strides = [1, 1]} : vector<2x8xf32> to vector<2x1xf32>
    %245 = vector.extract_strided_slice %186 {offsets = [6, 0], sizes = [1, 1], strides = [1, 1]} : vector<8x1xf32> to vector<1x1xf32>
    %246 = vector.broadcast %245 : vector<1x1xf32> to vector<2x1xf32>
    %247 = arith.mulf %244, %246 : vector<2x1xf32>
    %248 = vector.extract_strided_slice %104 {offsets = [2, 0], sizes = [1, 256], strides = [1, 1]} : vector<4x256xf32> to vector<1x256xf32>
    %249 = vector.broadcast %247 : vector<2x1xf32> to vector<2x256xf32>
    %250 = vector.broadcast %248 : vector<1x256xf32> to vector<2x256xf32>
    %251 = arith.mulf %249, %250 : vector<2x256xf32>
    %252 = arith.addf %243, %251 : vector<2x256xf32>
    %253 = vector.extract_strided_slice %187 {offsets = [0, 7], sizes = [2, 1], strides = [1, 1]} : vector<2x8xf32> to vector<2x1xf32>
    %254 = vector.extract_strided_slice %186 {offsets = [7, 0], sizes = [1, 1], strides = [1, 1]} : vector<8x1xf32> to vector<1x1xf32>
    %255 = vector.broadcast %254 : vector<1x1xf32> to vector<2x1xf32>
    %256 = arith.mulf %253, %255 : vector<2x1xf32>
    %257 = vector.extract_strided_slice %104 {offsets = [3, 0], sizes = [1, 256], strides = [1, 1]} : vector<4x256xf32> to vector<1x256xf32>
    %258 = vector.broadcast %256 : vector<2x1xf32> to vector<2x256xf32>
    %259 = vector.broadcast %257 : vector<1x256xf32> to vector<2x256xf32>
    %260 = arith.mulf %258, %259 : vector<2x256xf32>
    %261 = arith.addf %252, %260 : vector<2x256xf32>
    %262 = vector.broadcast %189 : vector<2x1xf32> to vector<2x256xf32>
    %263 = arith.addf %261, %262 : vector<2x256xf32>
    %264 = vector.extract_strided_slice %1 {offsets = [0, 0], sizes = [2, 256], strides = [1, 1]} : vector<4x256xf32> to vector<2x256xf32>
    %265 = arith.addf %263, %264 : vector<2x256xf32>
    %c0_32 = arith.constant 0 : index
    %c0_33 = arith.constant 0 : index
    %c0_34 = arith.constant 0 : index
    %266 = vector.load %arg7[%c0_32, %c0_33, %c0_34] : memref<1x4x256xf32, #tpu.memory_space<vmem>>, vector<1x2x256xf32>
    %267 = vector.shape_cast %266 : vector<1x2x256xf32> to vector<2x256xf32>
    %268 = vector.shape_cast %265 : vector<2x256xf32> to vector<1x2x256xf32>
    tpu.vector_store %arg7[%c0_32, %c0_33, %c0_34], %268 {strides = array<i32>} : memref<1x4x256xf32, #tpu.memory_space<vmem>>, vector<1x2x256xf32>,
    %269 = vector.extract_strided_slice %188 {offsets = [0, 4], sizes = [2, 1], strides = [1, 1]} : vector<2x9xf32> to vector<2x1xf32>
    %270 = vector.broadcast %269 : vector<2x1xf32> to vector<2x256xf32>
    %271 = arith.mulf %263, %270 : vector<2x256xf32>
    %272 = vector.broadcast %190 : vector<2x1xf32> to vector<2x256xf32>
    %273 = arith.addf %271, %272 : vector<2x256xf32>
    %c17_i32_35 = arith.constant 17 : i32
    %274 = tpu.dynamic_rotate %263 by %c17_i32_35 dim 1 : vector<2x256xf32>, i32 -> vector<2x256xf32>
    %275 = vector.extract_strided_slice %2 {offsets = [0, 0], sizes = [1, 256], strides = [1, 1]} : vector<8x256xf32> to vector<1x256xf32>
    %276 = vector.broadcast %275 : vector<1x256xf32> to vector<2x256xf32>
    %277 = arith.mulf %274, %276 : vector<2x256xf32>
    %278 = vector.extract_strided_slice %188 {offsets = [0, 0], sizes = [2, 1], strides = [1, 1]} : vector<2x9xf32> to vector<2x1xf32>
    %279 = vector.broadcast %278 : vector<2x1xf32> to vector<2x256xf32>
    %280 = arith.mulf %277, %279 : vector<2x256xf32>
    %281 = arith.addf %273, %280 : vector<2x256xf32>
    %c16_i32_36 = arith.constant 16 : i32
    %282 = tpu.dynamic_rotate %263 by %c16_i32_36 dim 1 : vector<2x256xf32>, i32 -> vector<2x256xf32>
    %283 = vector.extract_strided_slice %2 {offsets = [1, 0], sizes = [1, 256], strides = [1, 1]} : vector<8x256xf32> to vector<1x256xf32>
    %284 = vector.broadcast %283 : vector<1x256xf32> to vector<2x256xf32>
    %285 = arith.mulf %282, %284 : vector<2x256xf32>
    %286 = vector.extract_strided_slice %188 {offsets = [0, 1], sizes = [2, 1], strides = [1, 1]} : vector<2x9xf32> to vector<2x1xf32>
    %287 = vector.broadcast %286 : vector<2x1xf32> to vector<2x256xf32>
    %288 = arith.mulf %285, %287 : vector<2x256xf32>
    %289 = arith.addf %281, %288 : vector<2x256xf32>
    %c15_i32_37 = arith.constant 15 : i32
    %290 = tpu.dynamic_rotate %263 by %c15_i32_37 dim 1 : vector<2x256xf32>, i32 -> vector<2x256xf32>
    %291 = vector.extract_strided_slice %2 {offsets = [2, 0], sizes = [1, 256], strides = [1, 1]} : vector<8x256xf32> to vector<1x256xf32>
    %292 = vector.broadcast %291 : vector<1x256xf32> to vector<2x256xf32>
    %293 = arith.mulf %290, %292 : vector<2x256xf32>
    %294 = vector.extract_strided_slice %188 {offsets = [0, 2], sizes = [2, 1], strides = [1, 1]} : vector<2x9xf32> to vector<2x1xf32>
    %295 = vector.broadcast %294 : vector<2x1xf32> to vector<2x256xf32>
    %296 = arith.mulf %293, %295 : vector<2x256xf32>
    %297 = arith.addf %289, %296 : vector<2x256xf32>
    %c1_i32_38 = arith.constant 1 : i32
    %298 = tpu.dynamic_rotate %263 by %c1_i32_38 dim 1 : vector<2x256xf32>, i32 -> vector<2x256xf32>
    %299 = vector.extract_strided_slice %2 {offsets = [3, 0], sizes = [1, 256], strides = [1, 1]} : vector<8x256xf32> to vector<1x256xf32>
    %300 = vector.broadcast %299 : vector<1x256xf32> to vector<2x256xf32>
    %301 = arith.mulf %298, %300 : vector<2x256xf32>
    %302 = vector.extract_strided_slice %188 {offsets = [0, 3], sizes = [2, 1], strides = [1, 1]} : vector<2x9xf32> to vector<2x1xf32>
    %303 = vector.broadcast %302 : vector<2x1xf32> to vector<2x256xf32>
    %304 = arith.mulf %301, %303 : vector<2x256xf32>
    %305 = arith.addf %297, %304 : vector<2x256xf32>
    %c255_i32_39 = arith.constant 255 : i32
    %306 = tpu.dynamic_rotate %263 by %c255_i32_39 dim 1 : vector<2x256xf32>, i32 -> vector<2x256xf32>
    %307 = vector.extract_strided_slice %2 {offsets = [4, 0], sizes = [1, 256], strides = [1, 1]} : vector<8x256xf32> to vector<1x256xf32>
    %308 = vector.broadcast %307 : vector<1x256xf32> to vector<2x256xf32>
    %309 = arith.mulf %306, %308 : vector<2x256xf32>
    %310 = vector.extract_strided_slice %188 {offsets = [0, 5], sizes = [2, 1], strides = [1, 1]} : vector<2x9xf32> to vector<2x1xf32>
    %311 = vector.broadcast %310 : vector<2x1xf32> to vector<2x256xf32>
    %312 = arith.mulf %309, %311 : vector<2x256xf32>
    %313 = arith.addf %305, %312 : vector<2x256xf32>
    %c241_i32_40 = arith.constant 241 : i32
    %314 = tpu.dynamic_rotate %263 by %c241_i32_40 dim 1 : vector<2x256xf32>, i32 -> vector<2x256xf32>
    %315 = vector.extract_strided_slice %2 {offsets = [5, 0], sizes = [1, 256], strides = [1, 1]} : vector<8x256xf32> to vector<1x256xf32>
    %316 = vector.broadcast %315 : vector<1x256xf32> to vector<2x256xf32>
    %317 = arith.mulf %314, %316 : vector<2x256xf32>
    %318 = vector.extract_strided_slice %188 {offsets = [0, 6], sizes = [2, 1], strides = [1, 1]} : vector<2x9xf32> to vector<2x1xf32>
    %319 = vector.broadcast %318 : vector<2x1xf32> to vector<2x256xf32>
    %320 = arith.mulf %317, %319 : vector<2x256xf32>
    %321 = arith.addf %313, %320 : vector<2x256xf32>
    %c240_i32_41 = arith.constant 240 : i32
    %322 = tpu.dynamic_rotate %263 by %c240_i32_41 dim 1 : vector<2x256xf32>, i32 -> vector<2x256xf32>
    %323 = vector.extract_strided_slice %2 {offsets = [6, 0], sizes = [1, 256], strides = [1, 1]} : vector<8x256xf32> to vector<1x256xf32>
    %324 = vector.broadcast %323 : vector<1x256xf32> to vector<2x256xf32>
    %325 = arith.mulf %322, %324 : vector<2x256xf32>
    %326 = vector.extract_strided_slice %188 {offsets = [0, 7], sizes = [2, 1], strides = [1, 1]} : vector<2x9xf32> to vector<2x1xf32>
    %327 = vector.broadcast %326 : vector<2x1xf32> to vector<2x256xf32>
    %328 = arith.mulf %325, %327 : vector<2x256xf32>
    %329 = arith.addf %321, %328 : vector<2x256xf32>
    %c239_i32_42 = arith.constant 239 : i32
    %330 = tpu.dynamic_rotate %263 by %c239_i32_42 dim 1 : vector<2x256xf32>, i32 -> vector<2x256xf32>
    %331 = vector.extract_strided_slice %2 {offsets = [7, 0], sizes = [1, 256], strides = [1, 1]} : vector<8x256xf32> to vector<1x256xf32>
    %332 = vector.broadcast %331 : vector<1x256xf32> to vector<2x256xf32>
    %333 = arith.mulf %330, %332 : vector<2x256xf32>
    %334 = vector.extract_strided_slice %188 {offsets = [0, 8], sizes = [2, 1], strides = [1, 1]} : vector<2x9xf32> to vector<2x1xf32>
    %335 = vector.broadcast %334 : vector<2x1xf32> to vector<2x256xf32>
    %336 = arith.mulf %333, %335 : vector<2x256xf32>
    %337 = arith.addf %329, %336 : vector<2x256xf32>
    %338 = vector.extract_strided_slice %1 {offsets = [2, 0], sizes = [2, 256], strides = [1, 1]} : vector<4x256xf32> to vector<2x256xf32>
    %339 = arith.addf %337, %338 : vector<2x256xf32>
    %c0_43 = arith.constant 0 : index
    %c2 = arith.constant 2 : index
    %c0_44 = arith.constant 0 : index
    %340 = vector.load %arg7[%c0_43, %c2, %c0_44] : memref<1x4x256xf32, #tpu.memory_space<vmem>>, vector<1x2x256xf32>
    %341 = vector.shape_cast %340 : vector<1x2x256xf32> to vector<2x256xf32>
    %342 = vector.shape_cast %339 : vector<2x256xf32> to vector<1x2x256xf32>
    tpu.vector_store %arg7[%c0_43, %c2, %c0_44], %342 {strides = array<i32>} : memref<1x4x256xf32, #tpu.memory_space<vmem>>, vector<1x2x256xf32>,
    return
  }
  func.func @transform_0(%arg0: i32) -> (i32, i32, i32) {
    %c0_i32 = arith.constant 0 : i32
    %c0_i32_0 = arith.constant 0 : i32
    %c0_i32_1 = arith.constant 0 : i32
    return %arg0, %c0_i32, %c0_i32_0 : i32, i32, i32
  }
  func.func @transform_1(%arg0: i32) -> (i32, i32) {
    %c0_i32 = arith.constant 0 : i32
    %c0_i32_0 = arith.constant 0 : i32
    %c0_i32_1 = arith.constant 0 : i32
    return %c0_i32, %c0_i32_0 : i32, i32
  }
  func.func @transform_2(%arg0: i32) -> (i32, i32) {
    %c0_i32 = arith.constant 0 : i32
    %c0_i32_0 = arith.constant 0 : i32
    %c0_i32_1 = arith.constant 0 : i32
    return %c0_i32, %c0_i32_0 : i32, i32
  }
  func.func @transform_3(%arg0: i32) -> (i32, i32) {
    %c0_i32 = arith.constant 0 : i32
    %c0_i32_0 = arith.constant 0 : i32
    %c0_i32_1 = arith.constant 0 : i32
    return %c0_i32, %c0_i32_0 : i32, i32
  }
  func.func @transform_4(%arg0: i32) -> (i32, i32) {
    %c0_i32 = arith.constant 0 : i32
    %c0_i32_0 = arith.constant 0 : i32
    %c0_i32_1 = arith.constant 0 : i32
    return %c0_i32, %c0_i32_0 : i32, i32
  }
  func.func @transform_5(%arg0: i32) -> (i32, i32) {
    %c0_i32 = arith.constant 0 : i32
    %c0_i32_0 = arith.constant 0 : i32
    %c0_i32_1 = arith.constant 0 : i32
    return %c0_i32, %c0_i32_0 : i32, i32
  }
  func.func @transform_6(%arg0: i32) -> (i32, i32, i32) {
    %c0_i32 = arith.constant 0 : i32
    %c0_i32_0 = arith.constant 0 : i32
    %c0_i32_1 = arith.constant 0 : i32
    return %arg0, %c0_i32, %c0_i32_0 : i32, i32, i32
  }
}

</mosaic_0001>

<llo_original>
// kernel: tpu_custom_call.1
$region0: #{tpu_custom_call.1}
  #allocation0 [shape = 'u32[]', space=smem, size = 0x4, offset = 0x4, fixed_abs, tag = 'smem constant byte address 0x4 - core index']
  #allocation1 [shape = 'u32[72,128]{1,0:T(1,128)}', space=vmem, size = 0x9000, scoped, tag = 'internal scratch']
  %s0 = inlined_call_operand.hbm [shape: f32[2,4,256], index: 0, kind: input, shape index: {}]
  %s1 = inlined_call_operand.hbm [shape: f32[4,15], index: 1, kind: input, shape index: {}]
  %s2 = inlined_call_operand.hbm [shape: f32[2,19], index: 2, kind: input, shape index: {}]
  %s3 = inlined_call_operand.hbm [shape: f32[4,9], index: 3, kind: input, shape index: {}]
  %s4 = inlined_call_operand.hbm [shape: f32[8,5], index: 4, kind: input, shape index: {}]
  %s5 = inlined_call_operand.hbm [shape: f32[8,256], index: 5, kind: input, shape index: {}]
  %s6 = inlined_call_operand.hbm [shape: f32[2,4,256], index: 6, kind: output, shape index: {}]
  %s7 = sld [smem:[#allocation0]]
  $region81: #{tpu_custom_call.1} parent=0
    _
  %s9 = ssub.s32 1, %s7
  %s10 = scalar_select 0, %s9, %s7
  $region1: #{tpu_custom_call.1} parent=0
    #allocation2 [shape = 'u8[8192]{0}', space=vmem, size = 0x2000, scoped, tag = 'input window, operand 0']
    #allocation3 [shape = 's32[2]{0}', space=sflag, size = 0x8, scoped, tag = 'scoped memory for tpu_custom_call.1']
    #allocation4 [shape = 's32[2]{0}', space=sflag, size = 0x8, scoped, tag = 'scoped memory for tpu_custom_call.1']
    #allocation5 [shape = 'u8[2048]{0}', space=vmem, size = 0x800, scoped, tag = 'input window, operand 1, single buffered']
    #allocation6 [shape = 's32[1]{0}', space=sflag, size = 0x4, scoped, tag = 'scoped memory for tpu_custom_call.1']
    #allocation7 [shape = 'u8[1024]{0}', space=vmem, size = 0x400, scoped, tag = 'input window, operand 2, single buffered']
    #allocation8 [shape = 'u8[2048]{0}', space=vmem, size = 0x800, scoped, tag = 'input window, operand 3, single buffered']
    #allocation9 [shape = 's32[1]{0}', space=sflag, size = 0x4, scoped, tag = 'scoped memory for tpu_custom_call.1']
    #allocation10 [shape = 'u8[4096]{0}', space=vmem, size = 0x1000, scoped, tag = 'input window, operand 4, single buffered']
    #allocation11 [shape = 'u8[8192]{0}', space=vmem, size = 0x2000, scoped, tag = 'input window, operand 5, single buffered']
    #allocation12 [shape = 's32[1]{0}', space=sflag, size = 0x4, scoped, tag = 'scoped memory for tpu_custom_call.1']
    #allocation13 [shape = 'u8[8192]{0}', space=vmem, size = 0x2000, scoped, tag = 'output window, operand 0']
    %11 = vsyncpa [#allocation3], 0
    %s12 = scalar_lea.sflag [#allocation3], 1
    %13 = vsyncpa %s12, 0
    %14 = vsyncpa [#allocation6], 0
    %15 = vsyncpa [#allocation9], 0
    %16 = vsyncpa [#allocation12], 0
    %17 = vsyncpa [#allocation4], 0
    %s18 = scalar_lea.sflag [#allocation4], 1
    %19 = vsyncpa %s18, 0
    loop: start=0, step=1, limit=4
    $region2: #{tpu_custom_call.1} parent=1 // loop_pre_header
      _
    $region3: #{tpu_custom_call.1} parent=1 // loop_header
      %s21 = sphi 0, %s25
      %p22 = scmp.ge.s32.totalorder %s21, 4
      %s31 = sphi 0, %s33
      %s34 = sphi 0, %s31
      %s35 = sphi 0, %s34
      %s51 = sphi 0, %s35
      %s55 = sphi 0, %s55
      %s57 = sphi 0, %s55
      %s58 = sphi 0, %s57
      %s72 = sphi 0, %s58
      %s76 = sphi 0, %s76
      %s78 = sphi 0, %s76
      %s79 = sphi 0, %s78
      %s93 = sphi 0, %s79
      %s97 = sphi 0, %s97
      %s99 = sphi 0, %s97
      %s100 = sphi 0, %s99
      %s114 = sphi 0, %s100
      %s118 = sphi 0, %s118
      %s120 = sphi 0, %s118
      %s121 = sphi 0, %s120
      %s135 = sphi 0, %s121
      %s139 = sphi 0, %s139
      %s141 = sphi 0, %s139
      %s142 = sphi 0, %s141
      %s156 = sphi 0, %s142
      %s162 = sphi 0, %s164
      %s165 = sphi 0, %s162
      %s166 = sphi 0, %s165
      %s182 = sphi 0, %s166
    $region4: #{tpu_custom_call.1} parent=1 // loop_header_branch
      %24 = sbr.rel (%p22) target = $region8
    $region5: #{tpu_custom_call.1} parent=1 // loop_body
      %s26 = ssub.s32 %s21, 1
      %s27 = ssub.s32 %s21, 2
      %s28 = sadd.s32 %s21, 1
      %s29 = ssub.s32 %s21, %s28
      %p30 = scmp.eq.s32.totalorder %s29, 0
      %s32 = sadd.s32 %s31, 1
      %s33 = scalar_select %p30, %s31, %s32
      %p36 = pneg %p30
      %p37 = scmp.eq.s32.totalorder %s21, 1
      %p38 = por %p36, %p37
      %p39 = scmp.ne.s32.totalorder %s31, %s34
      %p40 = scmp.eq.s32.totalorder %s21, 0
      %p41 = por %p39, %p40
      %p42 = scmp.ne.s32.totalorder %s31, %s34
      %p43 = scmp.eq.s32.totalorder %s26, 1
      %p44 = por %p42, %p43
      %p45 = scmp.ne.s32.totalorder %s34, %s35
      %p46 = scmp.eq.s32.totalorder %s26, 0
      %p47 = por %p45, %p46
      %p48 = scmp.ne.s32.totalorder %s34, %s35
      %p49 = scmp.eq.s32.totalorder %s27, 1
      %p50 = por %p48, %p49
      %p52 = scmp.ne.s32.totalorder %s35, %s51
      %p53 = scmp.eq.s32.totalorder %s27, 0
      %p54 = por %p52, %p53
      %s56 = sadd.s32 %s55, 1
      %p59 = scmp.eq.s32.totalorder %s21, 1
      %p60 = scmp.ne.s32.totalorder %s55, %s57
      %p61 = scmp.eq.s32.totalorder %s21, 0
      %p62 = por %p60, %p61
      %p63 = scmp.ne.s32.totalorder %s55, %s57
      %p64 = scmp.eq.s32.totalorder %s26, 1
      %p65 = por %p63, %p64
      %p66 = scmp.ne.s32.totalorder %s57, %s58
      %p67 = scmp.eq.s32.totalorder %s26, 0
      %p68 = por %p66, %p67
      %p69 = scmp.ne.s32.totalorder %s57, %s58
      %p70 = scmp.eq.s32.totalorder %s27, 1
      %p71 = por %p69, %p70
      %p73 = scmp.ne.s32.totalorder %s58, %s72
      %p74 = scmp.eq.s32.totalorder %s27, 0
      %p75 = por %p73, %p74
      %s77 = sadd.s32 %s76, 1
      %p80 = scmp.eq.s32.totalorder %s21, 1
      %p81 = scmp.ne.s32.totalorder %s76, %s78
      %p82 = scmp.eq.s32.totalorder %s21, 0
      %p83 = por %p81, %p82
      %p84 = scmp.ne.s32.totalorder %s76, %s78
      %p85 = scmp.eq.s32.totalorder %s26, 1
      %p86 = por %p84, %p85
      %p87 = scmp.ne.s32.totalorder %s78, %s79
      %p88 = scmp.eq.s32.totalorder %s26, 0
      %p89 = por %p87, %p88
      %p90 = scmp.ne.s32.totalorder %s78, %s79
      %p91 = scmp.eq.s32.totalorder %s27, 1
      %p92 = por %p90, %p91
      %p94 = scmp.ne.s32.totalorder %s79, %s93
      %p95 = scmp.eq.s32.totalorder %s27, 0
      %p96 = por %p94, %p95
      %s98 = sadd.s32 %s97, 1
      %p101 = scmp.eq.s32.totalorder %s21, 1
      %p102 = scmp.ne.s32.totalorder %s97, %s99
      %p103 = scmp.eq.s32.totalorder %s21, 0
      %p104 = por %p102, %p103
      %p105 = scmp.ne.s32.totalorder %s97, %s99
      %p106 = scmp.eq.s32.totalorder %s26, 1
      %p107 = por %p105, %p106
      %p108 = scmp.ne.s32.totalorder %s99, %s100
      %p109 = scmp.eq.s32.totalorder %s26, 0
      %p110 = por %p108, %p109
      %p111 = scmp.ne.s32.totalorder %s99, %s100
      %p112 = scmp.eq.s32.totalorder %s27, 1
      %p113 = por %p111, %p112
      %p115 = scmp.ne.s32.totalorder %s100, %s114
      %p116 = scmp.eq.s32.totalorder %s27, 0
      %p117 = por %p115, %p116
      %s119 = sadd.s32 %s118, 1
      %p122 = scmp.eq.s32.totalorder %s21, 1
      %p123 = scmp.ne.s32.totalorder %s118, %s120
      %p124 = scmp.eq.s32.totalorder %s21, 0
      %p125 = por %p123, %p124
      %p126 = scmp.ne.s32.totalorder %s118, %s120
      %p127 = scmp.eq.s32.totalorder %s26, 1
      %p128 = por %p126, %p127
      %p129 = scmp.ne.s32.totalorder %s120, %s121
      %p130 = scmp.eq.s32.totalorder %s26, 0
      %p131 = por %p129, %p130
      %p132 = scmp.ne.s32.totalorder %s120, %s121
      %p133 = scmp.eq.s32.totalorder %s27, 1
      %p134 = por %p132, %p133
      %p136 = scmp.ne.s32.totalorder %s121, %s135
      %p137 = scmp.eq.s32.totalorder %s27, 0
      %p138 = por %p136, %p137
      %s140 = sadd.s32 %s139, 1
      %p143 = scmp.eq.s32.totalorder %s21, 1
      %p144 = scmp.ne.s32.totalorder %s139, %s141
      %p145 = scmp.eq.s32.totalorder %s21, 0
      %p146 = por %p144, %p145
      %p147 = scmp.ne.s32.totalorder %s139, %s141
      %p148 = scmp.eq.s32.totalorder %s26, 1
      %p149 = por %p147, %p148
      %p150 = scmp.ne.s32.totalorder %s141, %s142
      %p151 = scmp.eq.s32.totalorder %s26, 0
      %p152 = por %p150, %p151
      %p153 = scmp.ne.s32.totalorder %s141, %s142
      %p154 = scmp.eq.s32.totalorder %s27, 1
      %p155 = por %p153, %p154
      %p157 = scmp.ne.s32.totalorder %s142, %s156
      %p158 = scmp.eq.s32.totalorder %s27, 0
      %p159 = por %p157, %p158
      %s160 = ssub.s32 %s21, %s28
      %p161 = scmp.eq.s32.totalorder %s160, 0
      %s163 = sadd.s32 %s162, 1
      %s164 = scalar_select %p161, %s162, %s163
      %p167 = pneg %p161
      %p168 = scmp.eq.s32.totalorder %s21, 1
      %p169 = por %p167, %p168
      %p170 = scmp.ne.s32.totalorder %s162, %s165
      %p171 = scmp.eq.s32.totalorder %s21, 0
      %p172 = por %p170, %p171
      %p173 = scmp.ne.s32.totalorder %s162, %s165
      %p174 = scmp.eq.s32.totalorder %s26, 1
      %p175 = por %p173, %p174
      %p176 = scmp.ne.s32.totalorder %s165, %s166
      %p177 = scmp.eq.s32.totalorder %s26, 0
      %p178 = por %p176, %p177
      %p179 = scmp.ne.s32.totalorder %s165, %s166
      %p180 = scmp.eq.s32.totalorder %s27, 1
      %p181 = por %p179, %p180
      %p183 = scmp.ne.s32.totalorder %s166, %s182
      %p184 = scmp.eq.s32.totalorder %s27, 0
      %p185 = por %p183, %p184
      %p186 = scmp.le.s32.totalorder 1, %s21
      %p187 = scmp.lt.s32.totalorder %s21, 3
      %p188 = pnand %p186, %p187
      %p189 = pneg %p188
      // Predicated region
      $region9: #{tpu_custom_call.1} parent=5 // pred_check
        _
      $region10: #{tpu_custom_call.1} parent=5 // pred_check_branch
        %191 = sbr.rel (%p188) target = $region12
      $region11: #{tpu_custom_call.1} parent=5 // pred_region
        %s192 = ssub.s32 %s21, 1
        // Predicated region
        $region13: #{tpu_custom_call.1} parent=11 // pred_check
          %p193 = pneg %p68
        $region14: #{tpu_custom_call.1} parent=11 // pred_check_branch
          %195 = sbr.rel (%p193) target = $region16
        $region15: #{tpu_custom_call.1} parent=11 // pred_region
          %197 = vsyncadd [#allocation6], 0
          %s199 = sshll.u32 %s1, 4
          %s200 = int_to_ptr.hbm [resolvable:$true] %s199
          %s201 = sshll.u32 [#allocation5], 4
          %s202 = int_to_ptr.vmem [resolvable:$true] %s201
          %204 = dma.hbm_to_vmem [thread:$0]  %s200, 64, %s202, [#allocation6]
        $region16: #{tpu_custom_call.1} parent=11 // pred_fallthru
          _
        // Predicated region
        $region17: #{tpu_custom_call.1} parent=11 // pred_check
          %p205 = pneg %p89
        $region18: #{tpu_custom_call.1} parent=11 // pred_check_branch
          %207 = sbr.rel (%p205) target = $region20
        $region19: #{tpu_custom_call.1} parent=11 // pred_region
          %209 = vsyncadd [#allocation6], 0
          %s211 = sshll.u32 %s2, 4
          %s212 = int_to_ptr.hbm [resolvable:$true] %s211
          %s213 = sshll.u32 [#allocation7], 4
          %s214 = int_to_ptr.vmem [resolvable:$true] %s213
          %216 = dma.hbm_to_vmem [thread:$0]  %s212, 32, %s214, [#allocation6]
        $region20: #{tpu_custom_call.1} parent=11 // pred_fallthru
          _
        // Predicated region
        $region21: #{tpu_custom_call.1} parent=11 // pred_check
          %p217 = pneg %p110
        $region22: #{tpu_custom_call.1} parent=11 // pred_check_branch
          %219 = sbr.rel (%p217) target = $region24
        $region23: #{tpu_custom_call.1} parent=11 // pred_region
          %221 = vsyncadd [#allocation9], 0
          %s223 = sshll.u32 %s3, 4
          %s224 = int_to_ptr.hbm [resolvable:$true] %s223
          %s225 = sshll.u32 [#allocation8], 4
          %s226 = int_to_ptr.vmem [resolvable:$true] %s225
          %228 = dma.hbm_to_vmem [thread:$0]  %s224, 64, %s226, [#allocation9]
        $region24: #{tpu_custom_call.1} parent=11 // pred_fallthru
          _
        // Predicated region
        $region25: #{tpu_custom_call.1} parent=11 // pred_check
          %p229 = pneg %p131
        $region26: #{tpu_custom_call.1} parent=11 // pred_check_branch
          %231 = sbr.rel (%p229) target = $region28
        $region27: #{tpu_custom_call.1} parent=11 // pred_region
          %233 = vsyncadd [#allocation9], 0
          %s235 = sshll.u32 %s4, 4
          %s236 = int_to_ptr.hbm [resolvable:$true] %s235
          %s237 = sshll.u32 [#allocation10], 4
          %s238 = int_to_ptr.vmem [resolvable:$true] %s237
          %240 = dma.hbm_to_vmem [thread:$0]  %s236, 128, %s238, [#allocation9]
        $region28: #{tpu_custom_call.1} parent=11 // pred_fallthru
          _
        // Predicated region
        $region29: #{tpu_custom_call.1} parent=11 // pred_check
          %p241 = pneg %p152
        $region30: #{tpu_custom_call.1} parent=11 // pred_check_branch
          %243 = sbr.rel (%p241) target = $region32
        $region31: #{tpu_custom_call.1} parent=11 // pred_region
          %245 = vsyncadd [#allocation12], 0
          %s247 = sshll.u32 %s5, 4
          %s248 = int_to_ptr.hbm [resolvable:$true] %s247
          %s249 = sshll.u32 [#allocation11], 4
          %s250 = int_to_ptr.vmem [resolvable:$true] %s249
          %252 = dma.hbm_to_vmem [thread:$0]  %s248, 256, %s250, [#allocation12]
        $region32: #{tpu_custom_call.1} parent=11 // pred_fallthru
          _
      $region12: #{tpu_custom_call.1} parent=5 // pred_fallthru
        _
      %p253 = scmp.lt.s32.totalorder %s21, 2
      // Predicated region
      $region33: #{tpu_custom_call.1} parent=5 // pred_check
        %p254 = pneg %p253
      $region34: #{tpu_custom_call.1} parent=5 // pred_check_branch
        %256 = sbr.rel (%p254) target = $region36
      $region35: #{tpu_custom_call.1} parent=5 // pred_region
        // Predicated region
        $region37: #{tpu_custom_call.1} parent=35 // pred_check
          %p257 = pneg %p41
        $region38: #{tpu_custom_call.1} parent=35 // pred_check_branch
          %259 = sbr.rel (%p257) target = $region40
        $region39: #{tpu_custom_call.1} parent=35 // pred_region
          %s260 = sand.u32 %s31, 1
          %s261 = scalar_lea.sflag [#allocation3], %s260
          %s262 = sand.u32 %s31, 1
          %s263 = smul.addr %s262, 8
          %s264 = scalar_lea.vmem [#allocation2], %s263
          %266 = vsyncadd %s261, 0
          %s267 = smul.addr %s21, 2
          %s268 = smul.addr %s267, 4
          %s269 = scalar_lea.hbm %s0, %s268
          %s271 = sshll.u32 %s269, 4
          %s272 = int_to_ptr.hbm [resolvable:$true] %s271
          %s273 = sshll.u32 %s264, 4
          %s274 = int_to_ptr.vmem [resolvable:$true] %s273
          %276 = dma.hbm_to_vmem [thread:$0]  %s272, 128, %s274, %s261
        $region40: #{tpu_custom_call.1} parent=35 // pred_fallthru
          _
      $region36: #{tpu_custom_call.1} parent=5 // pred_fallthru
        _
      %p277 = scmp.le.s32.totalorder 1, %s21
      %p278 = scmp.lt.s32.totalorder %s21, 3
      %p279 = pnand %p277, %p278
      %p280 = pneg %p279
      // Predicated region
      $region41: #{tpu_custom_call.1} parent=5 // pred_check
        _
      $region42: #{tpu_custom_call.1} parent=5 // pred_check_branch
        %282 = sbr.rel (%p279) target = $region44
      $region43: #{tpu_custom_call.1} parent=5 // pred_region
        %s283 = ssub.s32 %s21, 1
        %s284 = sand.u32 %s34, 1
        %s285 = scalar_lea.sflag [#allocation3], %s284
        %s286 = sand.u32 %s34, 1
        %s287 = smul.addr %s286, 8
        %s288 = scalar_lea.vmem [#allocation2], %s287
        // Predicated region
        $region45: #{tpu_custom_call.1} parent=43 // pred_check
          %p289 = pneg %p47
        $region46: #{tpu_custom_call.1} parent=43 // pred_check_branch
          %291 = sbr.rel (%p289) target = $region48
        $region47: #{tpu_custom_call.1} parent=43 // pred_region
          %293 = dma.done %s285, 128
        $region48: #{tpu_custom_call.1} parent=43 // pred_fallthru
          _
        // Predicated region
        $region49: #{tpu_custom_call.1} parent=43 // pred_check
          %p294 = pneg %p68
        $region50: #{tpu_custom_call.1} parent=43 // pred_check_branch
          %296 = sbr.rel (%p294) target = $region52
        $region51: #{tpu_custom_call.1} parent=43 // pred_region
          %298 = dma.done [#allocation6], 64
        $region52: #{tpu_custom_call.1} parent=43 // pred_fallthru
          _
        // Predicated region
        $region53: #{tpu_custom_call.1} parent=43 // pred_check
          %p299 = pneg %p89
        $region54: #{tpu_custom_call.1} parent=43 // pred_check_branch
          %301 = sbr.rel (%p299) target = $region56
        $region55: #{tpu_custom_call.1} parent=43 // pred_region
          %303 = dma.done [#allocation6], 32
        $region56: #{tpu_custom_call.1} parent=43 // pred_fallthru
          _
        // Predicated region
        $region57: #{tpu_custom_call.1} parent=43 // pred_check
          %p304 = pneg %p110
        $region58: #{tpu_custom_call.1} parent=43 // pred_check_branch
          %306 = sbr.rel (%p304) target = $region60
        $region59: #{tpu_custom_call.1} parent=43 // pred_region
          %308 = dma.done [#allocation9], 64
        $region60: #{tpu_custom_call.1} parent=43 // pred_fallthru
          _
        // Predicated region
        $region61: #{tpu_custom_call.1} parent=43 // pred_check
          %p309 = pneg %p131
        $region62: #{tpu_custom_call.1} parent=43 // pred_check_branch
          %311 = sbr.rel (%p309) target = $region64
        $region63: #{tpu_custom_call.1} parent=43 // pred_region
          %313 = dma.done [#allocation9], 128
        $region64: #{tpu_custom_call.1} parent=43 // pred_fallthru
          _
        // Predicated region
        $region65: #{tpu_custom_call.1} parent=43 // pred_check
          %p314 = pneg %p152
        $region66: #{tpu_custom_call.1} parent=43 // pred_check_branch
          %316 = sbr.rel (%p314) target = $region68
        $region67: #{tpu_custom_call.1} parent=43 // pred_region
          %318 = dma.done [#allocation12], 256
        $region68: #{tpu_custom_call.1} parent=43 // pred_fallthru
          _
        %s319 = sand.u32 %s34, 1
        %s320 = scalar_lea.sflag [#allocation3], %s319
        %s321 = sand.u32 %s34, 1
        %s322 = smul.addr %s321, 8
        %s323 = scalar_lea.vmem [#allocation2], %s322
        %p324 = pneg %p47
        %p325 = pneg %p44
        %p326 = pneg %p68
        %p327 = pneg %p65
        %p328 = pneg %p89
        %p329 = pneg %p86
        %p330 = pneg %p110
        %p331 = pneg %p107
        %p332 = pneg %p131
        %p333 = pneg %p128
        %p334 = pneg %p152
        %p335 = pneg %p149
        %p336 = pneg %p178
        %p337 = pneg %p175
        %s338 = sand.u32 %s165, 1
        %s339 = scalar_lea.sflag [#allocation4], %s338
        %s340 = sand.u32 %s165, 1
        %s341 = smul.addr %s340, 8
        %s342 = scalar_lea.vmem [#allocation13], %s341
        %v343 = vld [vmem:[%s288] sm:$0xff]
        %v344 = vld [vmem:[#allocation11] sm:$0xff]
        %v345 = vld [vmem:[#allocation11 + $0x8] sm:$0xff]
        %v346 = vld [vmem:[#allocation5] sm:$0xf]
        %348 = vset.pattern.permute.xlu0 0
        %349 = vperm.xlu0 %348, %v346
        %v350 = vpop.permute.xlu0 %349
        %v353 = vperm.slane %v343, 0
        %v354 = vperm.slane %v343, 4
        %v357 = vperm.slane %v353, 0
        %v358 = vperm.slane %v354, 0
        %v359 = vmul.f32 %v350, %v357
        %v360 = vmul.f32 %v350, %v358
        %361 = vset.pattern.permute.xlu0 1
        %362 = vperm.xlu0 %361, %v346
        %v363 = vpop.permute.xlu0 %362
        %v365 = vperm.slane %v343, 1
        %v366 = vperm.slane %v343, 5
        %v369 = vperm.slane %v365, 1
        %v370 = vperm.slane %v366, 1
        %v371 = vmul.f32 %v363, %v369
        %v372 = vmul.f32 %v363, %v370
        %v373 = vadd.f32 %v359, %v371
        %v374 = vadd.f32 %v360, %v372
        %375 = vset.pattern.permute.xlu0 2
        %376 = vperm.xlu0 %375, %v346
        %v377 = vpop.permute.xlu0 %376
        %v379 = vperm.slane %v343, 2
        %v380 = vperm.slane %v343, 6
        %v383 = vperm.slane %v379, 2
        %v384 = vperm.slane %v380, 2
        %v385 = vmul.f32 %v377, %v383
        %v386 = vmul.f32 %v377, %v384
        %v387 = vadd.f32 %v373, %v385
        %v388 = vadd.f32 %v374, %v386
        %389 = vset.pattern.permute.xlu0 3
        %390 = vperm.xlu0 %389, %v346
        %v391 = vpop.permute.xlu0 %390
        %v393 = vperm.slane %v343, 3
        %v394 = vperm.slane %v343, 7
        %v397 = vperm.slane %v393, 3
        %v398 = vperm.slane %v394, 3
        %v399 = vmul.f32 %v391, %v397
        %v400 = vmul.f32 %v391, %v398
        %v401 = vadd.f32 %v387, %v399
        %v402 = vadd.f32 %v388, %v400
        %403 = vset.pattern.permute.xlu0 13
        %404 = vperm.xlu0 %403, %v346
        %v405 = vpop.permute.xlu0 %404
        %v407 = vadd.f32 %v401, %v405
        %v408 = vadd.f32 %v402, %v405
        %v409 = vmax.f32 %v407, 0.0
        %v410 = vmax.f32 %v408, 0.0
        %411 = vset.pattern.permute.xlu0 8
        %412 = vperm.xlu0 %411, %v346
        %v413 = vpop.permute.xlu0 %412
        %v415 = vmul.f32 %v409, %v413
        %v416 = vmul.f32 %v410, %v413
        %417 = vset.pattern.permute.xlu0 14
        %418 = vperm.xlu0 %417, %v346
        %v419 = vpop.permute.xlu0 %418
        %v421 = vadd.f32 %v415, %v419
        %v422 = vadd.f32 %v416, %v419
        %423 = vrot.lane.b32.xlu0 %v409, 17
        %v424 = vpop.permute.xlu0 %423
        %425 = vrot.lane.b32.xlu0 %v410, 17
        %v426 = vpop.permute.xlu0 %425
        %v427 = vlaneseq
        %v428 = vand.u32 %v427, 127
        %vm429 = vcmp.lt.s32.totalorder %v428, 17
        %v430 = vsel %vm429, %v424, %v426
        %v431 = vsel %vm429, %v426, %v424
        %v432 = vperm.slane %v344, 0
        %v433 = vperm.slane %v345, 0
        %v434 = vmul.f32 %v431, %v432
        %v435 = vmul.f32 %v430, %v433
        %436 = vset.pattern.permute.xlu0 4
        %437 = vperm.xlu0 %436, %v346
        %v438 = vpop.permute.xlu0 %437
        %v440 = vmul.f32 %v434, %v438
        %v441 = vmul.f32 %v435, %v438
        %v442 = vadd.f32 %v421, %v440
        %v443 = vadd.f32 %v422, %v441
        %444 = vrot.lane.b32.xlu0 %v409, 16
        %v445 = vpop.permute.xlu0 %444
        %446 = vrot.lane.b32.xlu0 %v410, 16
        %v447 = vpop.permute.xlu0 %446
        %vm448 = vcmp.lt.s32.totalorder %v428, 16
        %v449 = vsel %vm448, %v445, %v447
        %v450 = vsel %vm448, %v447, %v445
        %v451 = vperm.slane %v344, 1
        %v452 = vperm.slane %v345, 1
        %v453 = vmul.f32 %v450, %v451
        %v454 = vmul.f32 %v449, %v452
        %455 = vset.pattern.permute.xlu0 5
        %456 = vperm.xlu0 %455, %v346
        %v457 = vpop.permute.xlu0 %456
        %v459 = vmul.f32 %v453, %v457
        %v460 = vmul.f32 %v454, %v457
        %v461 = vadd.f32 %v442, %v459
        %v462 = vadd.f32 %v443, %v460
        %463 = vrot.lane.b32.xlu0 %v409, 15
        %v464 = vpop.permute.xlu0 %463
        %465 = vrot.lane.b32.xlu0 %v410, 15
        %v466 = vpop.permute.xlu0 %465
        %vm467 = vcmp.lt.s32.totalorder %v428, 15
        %v468 = vsel %vm467, %v464, %v466
        %v469 = vsel %vm467, %v466, %v464
        %v470 = vperm.slane %v344, 2
        %v471 = vperm.slane %v345, 2
        %v472 = vmul.f32 %v469, %v470
        %v473 = vmul.f32 %v468, %v471
        %474 = vset.pattern.permute.xlu0 6
        %475 = vperm.xlu0 %474, %v346
        %v476 = vpop.permute.xlu0 %475
        %v478 = vmul.f32 %v472, %v476
        %v479 = vmul.f32 %v473, %v476
        %v480 = vadd.f32 %v461, %v478
        %v481 = vadd.f32 %v462, %v479
        %482 = vrot.lane.b32.xlu0 %v409, 1
        %v483 = vpop.permute.xlu0 %482
        %484 = vrot.lane.b32.xlu0 %v410, 1
        %v485 = vpop.permute.xlu0 %484
        %vm486 = vcmp.lt.s32.totalorder %v428, 1
        %v487 = vsel %vm486, %v483, %v485
        %v488 = vsel %vm486, %v485, %v483
        %v489 = vperm.slane %v344, 3
        %v490 = vperm.slane %v345, 3
        %v491 = vmul.f32 %v488, %v489
        %v492 = vmul.f32 %v487, %v490
        %493 = vset.pattern.permute.xlu0 7
        %494 = vperm.xlu0 %493, %v346
        %v495 = vpop.permute.xlu0 %494
        %v497 = vmul.f32 %v491, %v495
        %v498 = vmul.f32 %v492, %v495
        %v499 = vadd.f32 %v480, %v497
        %v500 = vadd.f32 %v481, %v498
        %501 = vrot.lane.b32.xlu0 %v409, 127
        %v502 = vpop.permute.xlu0 %501
        %503 = vrot.lane.b32.xlu0 %v410, 127
        %v504 = vpop.permute.xlu0 %503
        %vm505 = vcmp.lt.s32.totalorder %v428, 127
        %v506 = vsel %vm505, %v502, %v504
        %v507 = vsel %vm505, %v504, %v502
        %v508 = vperm.slane %v344, 4
        %v509 = vperm.slane %v345, 4
        %v510 = vmul.f32 %v506, %v508
        %v511 = vmul.f32 %v507, %v509
        %512 = vset.pattern.permute.xlu0 9
        %513 = vperm.xlu0 %512, %v346
        %v514 = vpop.permute.xlu0 %513
        %v516 = vmul.f32 %v510, %v514
        %v517 = vmul.f32 %v511, %v514
        %v518 = vadd.f32 %v499, %v516
        %v519 = vadd.f32 %v500, %v517
        %520 = vrot.lane.b32.xlu0 %v409, 113
        %v521 = vpop.permute.xlu0 %520
        %522 = vrot.lane.b32.xlu0 %v410, 113
        %v523 = vpop.permute.xlu0 %522
        %vm524 = vcmp.lt.s32.totalorder %v428, 113
        %v525 = vsel %vm524, %v521, %v523
        %v526 = vsel %vm524, %v523, %v521
        %v527 = vperm.slane %v344, 5
        %v528 = vperm.slane %v345, 5
        %v529 = vmul.f32 %v525, %v527
        %v530 = vmul.f32 %v526, %v528
        %531 = vset.pattern.permute.xlu0 10
        %532 = vperm.xlu0 %531, %v346
        %v533 = vpop.permute.xlu0 %532
        %v535 = vmul.f32 %v529, %v533
        %v536 = vmul.f32 %v530, %v533
        %v537 = vadd.f32 %v518, %v535
        %v538 = vadd.f32 %v519, %v536
        %539 = vrot.lane.b32.xlu0 %v409, 112
        %v540 = vpop.permute.xlu0 %539
        %541 = vrot.lane.b32.xlu0 %v410, 112
        %v542 = vpop.permute.xlu0 %541
        %vm543 = vcmp.lt.s32.totalorder %v428, 112
        %v544 = vsel %vm543, %v540, %v542
        %v545 = vsel %vm543, %v542, %v540
        %v546 = vperm.slane %v344, 6
        %v547 = vperm.slane %v345, 6
        %v548 = vmul.f32 %v544, %v546
        %v549 = vmul.f32 %v545, %v547
        %550 = vset.pattern.permute.xlu0 11
        %551 = vperm.xlu0 %550, %v346
        %v552 = vpop.permute.xlu0 %551
        %v554 = vmul.f32 %v548, %v552
        %v555 = vmul.f32 %v549, %v552
        %v556 = vadd.f32 %v537, %v554
        %v557 = vadd.f32 %v538, %v555
        %558 = vrot.lane.b32.xlu0 %v409, 111
        %v559 = vpop.permute.xlu0 %558
        %560 = vrot.lane.b32.xlu0 %v410, 111
        %v561 = vpop.permute.xlu0 %560
        %vm562 = vcmp.lt.s32.totalorder %v428, 111
        %v563 = vsel %vm562, %v559, %v561
        %v564 = vsel %vm562, %v561, %v559
        %v565 = vperm.slane %v344, 7
        %v566 = vperm.slane %v345, 7
        %v567 = vmul.f32 %v563, %v565
        %v568 = vmul.f32 %v564, %v566
        %569 = vset.pattern.permute.xlu0 12
        %570 = vperm.xlu0 %569, %v346
        %v571 = vpop.permute.xlu0 %570
        %v573 = vmul.f32 %v567, %v571
        %v574 = vmul.f32 %v568, %v571
        %v575 = vadd.f32 %v556, %v573
        %v576 = vadd.f32 %v557, %v574
        %v577 = vmax.f32 %v575, 0.0
        %v578 = vmax.f32 %v576, 0.0
        %vm579 = vcmask 1043456
        %v580 = vsel %vm579, %v409, 0.0
        %v581 = vsel %vm579, %v410, 0.0
        %v582 = vadd.f32 %v580, %v581
        %583 = vadd.xlane.f32.xlu0 %v582
        %v584 = vpop.xlane.xlu0 %583
        %v585 = vrcp.pop 256.0
        %v586 = vmul.f32 256.0, %v585
        %v587 = vsub.f32 1.0, %v586
        %v588 = vmul.f32 %v585, %v587
        %v589 = vadd.f32 %v585, %v588
        %vm590 = vweird.f32 %v585
        %v591 = vsel %vm590, %v585, %v589
        %v592 = vmul.f32 %v584, %v591
        %v593 = vsel %vm579, %v577, 0.0
        %v594 = vsel %vm579, %v578, 0.0
        %v595 = vadd.f32 %v593, %v594
        %596 = vadd.xlane.f32.xlu0 %v595
        %v597 = vpop.xlane.xlu0 %596
        %v598 = vmul.f32 %v597, %v591
        %v599 = vld [vmem:[#allocation8] sm:$0xf]
        %v600 = vld [vmem:[#allocation10] sm:$0xff]
        %v601 = vperm.slane %v592, 0
        %v602 = vmul.f32 %v599, %v601
        %604 = vrot.lane.b32.xlu0 %v602, 8
        %v605 = vpop.permute.xlu0 %604
        %v607 = vadd.f32 %v599, %v605
        %v608 = vperm.slane %v592, 1
        %v609 = vmul.f32 %v599, %v608
        %611 = vrot.lane.b32.xlu0 %v609, 7
        %v612 = vpop.permute.xlu0 %611
        %v614 = vadd.f32 %v607, %v612
        %v615 = vperm.slane %v592, 2
        %v616 = vmul.f32 %v599, %v615
        %618 = vrot.lane.b32.xlu0 %v616, 6
        %v619 = vpop.permute.xlu0 %618
        %v621 = vadd.f32 %v614, %v619
        %v622 = vperm.slane %v592, 3
        %v623 = vmul.f32 %v599, %v622
        %625 = vrot.lane.b32.xlu0 %v623, 5
        %v626 = vpop.permute.xlu0 %625
        %v628 = vadd.f32 %v621, %v626
        %v629 = vperm.slane %v598, 0
        %v630 = vmul.f32 %v599, %v629
        %632 = vrot.lane.b32.xlu0 %v630, 4
        %v633 = vpop.permute.xlu0 %632
        %v635 = vadd.f32 %v628, %v633
        %v636 = vperm.slane %v598, 1
        %v637 = vmul.f32 %v599, %v636
        %639 = vrot.lane.b32.xlu0 %v637, 3
        %v640 = vpop.permute.xlu0 %639
        %v642 = vadd.f32 %v635, %v640
        %v643 = vperm.slane %v598, 2
        %v644 = vmul.f32 %v599, %v643
        %646 = vrot.lane.b32.xlu0 %v644, 2
        %v647 = vpop.permute.xlu0 %646
        %v649 = vadd.f32 %v642, %v647
        %v650 = vperm.slane %v598, 3
        %v651 = vmul.f32 %v599, %v650
        %653 = vrot.lane.b32.xlu0 %v651, 1
        %v654 = vpop.permute.xlu0 %653
        %v656 = vadd.f32 %v649, %v654
        %v657 = vmax.f32 %v656, 0.0
        %v658 = vperm.slane %v657, 0
        %660 = vrot.lane.b32.xlu0 %v658, 120
        %v661 = vpop.permute.xlu0 %660
        %v663 = vmul.f32 %v600, %v661
        %665 = vrot.lane.b32.xlu0 %v663, 4
        %v666 = vpop.permute.xlu0 %665
        %v668 = vadd.f32 %v600, %v666
        %v669 = vperm.slane %v657, 1
        %671 = vrot.lane.b32.xlu0 %v669, 121
        %v672 = vpop.permute.xlu0 %671
        %v674 = vmul.f32 %v600, %v672
        %676 = vrot.lane.b32.xlu0 %v674, 3
        %v677 = vpop.permute.xlu0 %676
        %v679 = vadd.f32 %v668, %v677
        %v680 = vperm.slane %v657, 2
        %682 = vrot.lane.b32.xlu0 %v680, 122
        %v683 = vpop.permute.xlu0 %682
        %v685 = vmul.f32 %v600, %v683
        %687 = vrot.lane.b32.xlu0 %v685, 2
        %v688 = vpop.permute.xlu0 %687
        %v690 = vadd.f32 %v679, %v688
        %v691 = vperm.slane %v657, 3
        %693 = vrot.lane.b32.xlu0 %v691, 123
        %v694 = vpop.permute.xlu0 %693
        %v696 = vmul.f32 %v600, %v694
        %698 = vrot.lane.b32.xlu0 %v696, 1
        %v699 = vpop.permute.xlu0 %698
        %v701 = vadd.f32 %v690, %v699
        %v702 = vadd.f32 %v701, 3.0
        %v703 = vmax.f32 %v702, 0.0
        %v704 = vmin.f32 %v703, 6.0
        %v705 = vmul.f32 %v704, 0.16666667
        %v706 = vld [vmem:[#allocation7] sm:$0x3]
        %v707 = vperm.slane %v705, 0
        %709 = vrot.lane.b32.xlu0 %v707, 124
        %v710 = vpop.permute.xlu0 %709
        %v712 = vmul.f32 %v706, %v710
        %714 = vset.pattern.permute.xlu0 0
        %715 = vperm.xlu0 %714, %v712
        %v716 = vpop.permute.xlu0 %715
        %v718 = vperm.slane %v409, 0
        %v719 = vperm.slane %v410, 0
        %v720 = vmul.f32 %v716, %v718
        %v721 = vmul.f32 %v716, %v719
        %v722 = vperm.slane %v705, 1
        %724 = vrot.lane.b32.xlu0 %v722, 125
        %v725 = vpop.permute.xlu0 %724
        %v727 = vmul.f32 %v706, %v725
        %729 = vset.pattern.permute.xlu0 1
        %730 = vperm.xlu0 %729, %v727
        %v731 = vpop.permute.xlu0 %730
        %v733 = vperm.slane %v409, 1
        %v734 = vperm.slane %v410, 1
        %v735 = vmul.f32 %v731, %v733
        %v736 = vmul.f32 %v731, %v734
        %v737 = vadd.f32 %v720, %v735
        %v738 = vadd.f32 %v721, %v736
        %v739 = vperm.slane %v705, 2
        %741 = vrot.lane.b32.xlu0 %v739, 126
        %v742 = vpop.permute.xlu0 %741
        %v744 = vmul.f32 %v706, %v742
        %746 = vset.pattern.permute.xlu0 2
        %747 = vperm.xlu0 %746, %v744
        %v748 = vpop.permute.xlu0 %747
        %v750 = vperm.slane %v409, 2
        %v751 = vperm.slane %v410, 2
        %v752 = vmul.f32 %v748, %v750
        %v753 = vmul.f32 %v748, %v751
        %v754 = vadd.f32 %v737, %v752
        %v755 = vadd.f32 %v738, %v753
        %v756 = vperm.slane %v705, 3
        %758 = vrot.lane.b32.xlu0 %v756, 127
        %v759 = vpop.permute.xlu0 %758
        %v761 = vmul.f32 %v706, %v759
        %763 = vset.pattern.permute.xlu0 3
        %764 = vperm.xlu0 %763, %v761
        %v765 = vpop.permute.xlu0 %764
        %v767 = vperm.slane %v409, 3
        %v768 = vperm.slane %v410, 3
        %v769 = vmul.f32 %v765, %v767
        %v770 = vmul.f32 %v765, %v768
        %v771 = vadd.f32 %v754, %v769
        %v772 = vadd.f32 %v755, %v770
        %v773 = vperm.slane %v705, 4
        %v774 = vmul.f32 %v706, %v773
        %776 = vset.pattern.permute.xlu0 4
        %777 = vperm.xlu0 %776, %v774
        %v778 = vpop.permute.xlu0 %777
        %v780 = vperm.slane %v577, 0
        %v781 = vperm.slane %v578, 0
        %v782 = vmul.f32 %v778, %v780
        %v783 = vmul.f32 %v778, %v781
        %v784 = vadd.f32 %v771, %v782
        %v785 = vadd.f32 %v772, %v783
        %v786 = vperm.slane %v705, 5
        %788 = vrot.lane.b32.xlu0 %v786, 1
        %v789 = vpop.permute.xlu0 %788
        %v791 = vmul.f32 %v706, %v789
        %793 = vset.pattern.permute.xlu0 5
        %794 = vperm.xlu0 %793, %v791
        %v795 = vpop.permute.xlu0 %794
        %v797 = vperm.slane %v577, 1
        %v798 = vperm.slane %v578, 1
        %v799 = vmul.f32 %v795, %v797
        %v800 = vmul.f32 %v795, %v798
        %v801 = vadd.f32 %v784, %v799
        %v802 = vadd.f32 %v785, %v800
        %v803 = vperm.slane %v705, 6
        %805 = vrot.lane.b32.xlu0 %v803, 2
        %v806 = vpop.permute.xlu0 %805
        %v808 = vmul.f32 %v706, %v806
        %810 = vset.pattern.permute.xlu0 6
        %811 = vperm.xlu0 %810, %v808
        %v812 = vpop.permute.xlu0 %811
        %v814 = vperm.slane %v577, 2
        %v815 = vperm.slane %v578, 2
        %v816 = vmul.f32 %v812, %v814
        %v817 = vmul.f32 %v812, %v815
        %v818 = vadd.f32 %v801, %v816
        %v819 = vadd.f32 %v802, %v817
        %v820 = vperm.slane %v705, 7
        %822 = vrot.lane.b32.xlu0 %v820, 3
        %v823 = vpop.permute.xlu0 %822
        %v825 = vmul.f32 %v706, %v823
        %827 = vset.pattern.permute.xlu0 7
        %828 = vperm.xlu0 %827, %v825
        %v829 = vpop.permute.xlu0 %828
        %v831 = vperm.slane %v577, 3
        %v832 = vperm.slane %v578, 3
        %v833 = vmul.f32 %v829, %v831
        %v834 = vmul.f32 %v829, %v832
        %v835 = vadd.f32 %v818, %v833
        %v836 = vadd.f32 %v819, %v834
        %838 = vset.pattern.permute.xlu0 17
        %839 = vperm.xlu0 %838, %v706
        %v840 = vpop.permute.xlu0 %839
        %v842 = vadd.f32 %v835, %v840
        %v843 = vadd.f32 %v836, %v840
        %844 = vst [vmem:[#allocation1] ss:$2 sm:$0xff] %v343
        %v845 = vld.sshfl [vmem:[#allocation1] sm:$0xff pattern:$0x75316420]
        %v846 = vld.sshfl [vmem:[#allocation1 + $0x8] sm:$0xff pattern:$0x75316420]
        %v849 = vadd.f32 %v842, %v845
        %v850 = vadd.f32 %v843, %v846
        %v853 = vrot.slane %v850, 4
        %v854 = vsel %vm579, %v849, %v853
        %856 = vst [vmem:[%s342] sm:$0x33] %v854
        %857 = vset.pattern.permute.xlu0 12
        %858 = vperm.xlu0 %857, %v706
        %v859 = vpop.permute.xlu0 %858
        %v861 = vmul.f32 %v842, %v859
        %v862 = vmul.f32 %v843, %v859
        %863 = vset.pattern.permute.xlu0 18
        %864 = vperm.xlu0 %863, %v706
        %v865 = vpop.permute.xlu0 %864
        %v867 = vadd.f32 %v861, %v865
        %v868 = vadd.f32 %v862, %v865
        %869 = vrot.lane.b32.xlu0 %v842, 17
        %v870 = vpop.permute.xlu0 %869
        %871 = vrot.lane.b32.xlu0 %v843, 17
        %v872 = vpop.permute.xlu0 %871
        %v873 = vsel %vm429, %v870, %v872
        %v874 = vsel %vm429, %v872, %v870
        %v875 = vmul.f32 %v874, %v432
        %v876 = vmul.f32 %v873, %v433
        %877 = vset.pattern.permute.xlu0 8
        %878 = vperm.xlu0 %877, %v706
        %v879 = vpop.permute.xlu0 %878
        %v881 = vmul.f32 %v875, %v879
        %v882 = vmul.f32 %v876, %v879
        %v883 = vadd.f32 %v867, %v881
        %v884 = vadd.f32 %v868, %v882
        %885 = vrot.lane.b32.xlu0 %v842, 16
        %v886 = vpop.permute.xlu0 %885
        %887 = vrot.lane.b32.xlu0 %v843, 16
        %v888 = vpop.permute.xlu0 %887
        %v889 = vsel %vm448, %v886, %v888
        %v890 = vsel %vm448, %v888, %v886
        %v891 = vmul.f32 %v890, %v451
        %v892 = vmul.f32 %v889, %v452
        %893 = vset.pattern.permute.xlu0 9
        %894 = vperm.xlu0 %893, %v706
        %v895 = vpop.permute.xlu0 %894
        %v897 = vmul.f32 %v891, %v895
        %v898 = vmul.f32 %v892, %v895
        %v899 = vadd.f32 %v883, %v897
        %v900 = vadd.f32 %v884, %v898
        %901 = vrot.lane.b32.xlu0 %v842, 15
        %v902 = vpop.permute.xlu0 %901
        %903 = vrot.lane.b32.xlu0 %v843, 15
        %v904 = vpop.permute.xlu0 %903
        %v905 = vsel %vm467, %v902, %v904
        %v906 = vsel %vm467, %v904, %v902
        %v907 = vmul.f32 %v906, %v470
        %v908 = vmul.f32 %v905, %v471
        %909 = vset.pattern.permute.xlu0 10
        %910 = vperm.xlu0 %909, %v706
        %v911 = vpop.permute.xlu0 %910
        %v913 = vmul.f32 %v907, %v911
        %v914 = vmul.f32 %v908, %v911
        %v915 = vadd.f32 %v899, %v913
        %v916 = vadd.f32 %v900, %v914
        %917 = vrot.lane.b32.xlu0 %v842, 1
        %v918 = vpop.permute.xlu0 %917
        %919 = vrot.lane.b32.xlu0 %v843, 1
        %v920 = vpop.permute.xlu0 %919
        %v921 = vsel %vm486, %v918, %v920
        %v922 = vsel %vm486, %v920, %v918
        %v923 = vmul.f32 %v922, %v489
        %v924 = vmul.f32 %v921, %v490
        %925 = vset.pattern.permute.xlu0 11
        %926 = vperm.xlu0 %925, %v706
        %v927 = vpop.permute.xlu0 %926
        %v929 = vmul.f32 %v923, %v927
        %v930 = vmul.f32 %v924, %v927
        %v931 = vadd.f32 %v915, %v929
        %v932 = vadd.f32 %v916, %v930
        %933 = vrot.lane.b32.xlu0 %v842, 127
        %v934 = vpop.permute.xlu0 %933
        %935 = vrot.lane.b32.xlu0 %v843, 127
        %v936 = vpop.permute.xlu0 %935
        %v937 = vsel %vm505, %v934, %v936
        %v938 = vsel %vm505, %v936, %v934
        %v939 = vmul.f32 %v937, %v508
        %v940 = vmul.f32 %v938, %v509
        %941 = vset.pattern.permute.xlu0 13
        %942 = vperm.xlu0 %941, %v706
        %v943 = vpop.permute.xlu0 %942
        %v945 = vmul.f32 %v939, %v943
        %v946 = vmul.f32 %v940, %v943
        %v947 = vadd.f32 %v931, %v945
        %v948 = vadd.f32 %v932, %v946
        %949 = vrot.lane.b32.xlu0 %v842, 113
        %v950 = vpop.permute.xlu0 %949
        %951 = vrot.lane.b32.xlu0 %v843, 113
        %v952 = vpop.permute.xlu0 %951
        %v953 = vsel %vm524, %v950, %v952
        %v954 = vsel %vm524, %v952, %v950
        %v955 = vmul.f32 %v953, %v527
        %v956 = vmul.f32 %v954, %v528
        %957 = vset.pattern.permute.xlu0 14
        %958 = vperm.xlu0 %957, %v706
        %v959 = vpop.permute.xlu0 %958
        %v961 = vmul.f32 %v955, %v959
        %v962 = vmul.f32 %v956, %v959
        %v963 = vadd.f32 %v947, %v961
        %v964 = vadd.f32 %v948, %v962
        %965 = vrot.lane.b32.xlu0 %v842, 112
        %v966 = vpop.permute.xlu0 %965
        %967 = vrot.lane.b32.xlu0 %v843, 112
        %v968 = vpop.permute.xlu0 %967
        %v969 = vsel %vm543, %v966, %v968
        %v970 = vsel %vm543, %v968, %v966
        %v971 = vmul.f32 %v969, %v546
        %v972 = vmul.f32 %v970, %v547
        %973 = vset.pattern.permute.xlu0 15
        %974 = vperm.xlu0 %973, %v706
        %v975 = vpop.permute.xlu0 %974
        %v977 = vmul.f32 %v971, %v975
        %v978 = vmul.f32 %v972, %v975
        %v979 = vadd.f32 %v963, %v977
        %v980 = vadd.f32 %v964, %v978
        %981 = vrot.lane.b32.xlu0 %v842, 111
        %v982 = vpop.permute.xlu0 %981
        %983 = vrot.lane.b32.xlu0 %v843, 111
        %v984 = vpop.permute.xlu0 %983
        %v985 = vsel %vm562, %v982, %v984
        %v986 = vsel %vm562, %v984, %v982
        %v987 = vmul.f32 %v985, %v565
        %v988 = vmul.f32 %v986, %v566
        %989 = vset.pattern.permute.xlu0 16
        %990 = vperm.xlu0 %989, %v706
        %v991 = vpop.permute.xlu0 %990
        %v993 = vmul.f32 %v987, %v991
        %v994 = vmul.f32 %v988, %v991
        %v995 = vadd.f32 %v979, %v993
        %v996 = vadd.f32 %v980, %v994
        %997 = vst [vmem:[#allocation1] ss:$2 sm:$0xff] %v343
        %v998 = vld.sshfl [vmem:[#allocation1] sm:$0xff pattern:$0x75316420]
        %v999 = vld.sshfl [vmem:[#allocation1 + $0x8] sm:$0xff pattern:$0x75316420]
        %v1000 = vrot.slane %v998, 2
        %v1001 = vrot.slane %v999, 2
        %v1004 = vadd.f32 %v995, %v1000
        %v1005 = vadd.f32 %v996, %v1001
        %v1008 = vrot.slane %v1005, 4
        %v1009 = vsel %vm579, %v1004, %v1008
        %v1010 = vrot.slane %v1009, 6
        %1012 = vst [vmem:[%s342] sm:$0xcc] %v1010
        %s1013 = sand.u32 %s165, 1
        %s1014 = scalar_lea.sflag [#allocation4], %s1013
        %s1015 = sand.u32 %s165, 1
        %s1016 = smul.addr %s1015, 8
        %s1017 = scalar_lea.vmem [#allocation13], %s1016
        // Predicated region
        $region69: #{tpu_custom_call.1} parent=43 // pred_check
          %p1018 = pneg %p175
        $region70: #{tpu_custom_call.1} parent=43 // pred_check_branch
          %1020 = sbr.rel (%p1018) target = $region72
        $region71: #{tpu_custom_call.1} parent=43 // pred_region
          %1022 = vsyncadd %s1014, 0
          %s1023 = smul.addr %s26, 2
          %s1024 = smul.addr %s1023, 4
          %s1025 = scalar_lea.hbm %s6, %s1024
          %s1027 = sshll.u32 %s1017, 4
          %s1028 = int_to_ptr.vmem [resolvable:$true] %s1027
          %s1029 = sshll.u32 %s1025, 4
          %s1030 = int_to_ptr.hbm [resolvable:$true] %s1029
          %1032 = dma.vmem_to_hbm [thread:$0]  %s1028, 128, %s1030, %s1014
        $region72: #{tpu_custom_call.1} parent=43 // pred_fallthru
          _
      $region44: #{tpu_custom_call.1} parent=5 // pred_fallthru
        _
      %p1033 = scmp.le.s32.totalorder 2, %s21
      // Predicated region
      $region73: #{tpu_custom_call.1} parent=5 // pred_check
        %p1034 = pneg %p1033
      $region74: #{tpu_custom_call.1} parent=5 // pred_check_branch
        %1036 = sbr.rel (%p1034) target = $region76
      $region75: #{tpu_custom_call.1} parent=5 // pred_region
        %s1037 = ssub.s32 %s21, 2
        // Predicated region
        $region77: #{tpu_custom_call.1} parent=75 // pred_check
          %p1038 = pneg %p181
        $region78: #{tpu_custom_call.1} parent=75 // pred_check_branch
          %1040 = sbr.rel (%p1038) target = $region80
        $region79: #{tpu_custom_call.1} parent=75 // pred_region
          %s1041 = sand.u32 %s166, 1
          %s1042 = scalar_lea.sflag [#allocation4], %s1041
          %s1043 = sand.u32 %s166, 1
          %s1044 = smul.addr %s1043, 8
          %s1045 = scalar_lea.vmem [#allocation13], %s1044
          %1047 = dma.done %s1042, 128
        $region80: #{tpu_custom_call.1} parent=75 // pred_fallthru
          _
      $region76: #{tpu_custom_call.1} parent=5 // pred_fallthru
        _
    $region6: #{tpu_custom_call.1} parent=1 // loop_footer
      %s25 = sadd.s32 1, %s21
    $region7: #{tpu_custom_call.1} parent=1 // loop_footer_branch
      %20 = sbr.rel target = $region3
    $region8: #{tpu_custom_call.1} parent=1 // loop_exit
      _
    %1048 = vsyncpa [#allocation3], 1
    %s1049 = scalar_lea.sflag [#allocation3], 1
    %1050 = vsyncpa %s1049, 1
    %1051 = vsyncpa [#allocation6], 1
    %1052 = vsyncpa [#allocation9], 1
    %1053 = vsyncpa [#allocation12], 1
    %1054 = vsyncpa [#allocation4], 1
    %s1055 = scalar_lea.sflag [#allocation4], 1
    %1056 = vsyncpa %s1055, 1

</llo_original>
